<compile_context>
chip_gen: v7x
topology: tpu7x:2x2x1
jax: 0.10.0
libtpu: 0.0.40
codegen_flags: <defaults>
</compile_context>

<pallas_src>
import functools

import jax
import jax.numpy as jnp
from jax.experimental import pallas as pl
from jax.experimental.pallas import tpu as pltpu


# ---- "config" from the original repo (synthetic, deterministic) -------------
class config:
    anchor_ratios = (0.5, 1.0, 2.0)
    anchor_scales = (8, 16, 32)


def _rpn_head_kernel(x_ref, h0_ref, h1_ref, w1_ref, b1_ref, wh_ref, bh_ref,
                     out_ref, *, tile_h, W, C, out_c_pad):
    # x_ref:   (1, tile_h, W, 3C) bf16  -- dx-fused input rows [i*tile_h, i*tile_h + tile_h)
    # h0_ref:  (1, 1, W, 3C) bf16       -- halo row  i*tile_h + tile_h
    # h1_ref:  (1, 1, W, 3C) bf16       -- halo row  i*tile_h + tile_h + 1
    # w1_ref:  (3, 3C, C) bf16          -- conv1 weight, dy-major, (dx, Cin) fused into K
    # b1_ref:  (1, C) f32
    # wh_ref:  (C, out_c_pad) bf16      -- [wl | wd | zero-pad], lane-dense (mult. of 128)
    # bh_ref:  (1, out_c_pad) f32
    # out_ref: (1, tile_h, W, out_c_pad) f32
    K = 3 * C

    # (tile_h + 2)-row padded slab for this tile (concat along the untiled H axis).
    slab = jnp.concatenate([x_ref[0], h0_ref[0], h1_ref[0]], axis=0)

    # 3x3 "same" conv == 3 MXU matmuls of K = 3*C (dx taps already fused into channels).
    acc = jnp.zeros((tile_h * W, C), jnp.float32)
    for dy in range(3):
        lhs = slab[dy:dy + tile_h].reshape(tile_h * W, K)
        acc = acc + jnp.dot(lhs, w1_ref[dy], preferred_element_type=jnp.float32)

    feat = jnp.maximum(acc + b1_ref[...], 0.0).astype(jnp.bfloat16)   # ReLU(conv1), bf16 for MXU

    # Fused 1x1 heads: one lane-dense matmul -> unmasked 128-wide stores.
    out = jnp.dot(feat, wh_ref[...], preferred_element_type=jnp.float32) + bh_ref[...]
    out_ref[...] = out.reshape(1, tile_h, W, out_c_pad).astype(out_ref.dtype)


def _choose_tile_h(H, W, C, out_c_pad, budget_bytes=8 * 1024 * 1024):
    """Largest row tile dividing H whose per-step footprint (double-buffered bf16 input
    + halos, double-buffered f32 output, f32 temporaries) fits the budget. The budget is
    kept well under v7x's 64 MiB physical / 32 MiB scoped VMEM so pipelining stays alive."""
    best = 1
    for th in range(1, H + 1):
        if H % th:
            continue
        in_b = 2 * th * W * 3 * C * 2          # bf16 main input block, 2 buffers
        halo_b = 2 * 2 * W * 3 * C * 2         # two 1-row halos, 2 buffers
        out_b = 2 * th * W * out_c_pad * 4     # f32 lane-dense output block, 2 buffers
        tmp_b = th * W * (C + out_c_pad) * 4   # f32 acc + head-result values
        if in_b + halo_b + out_b + tmp_b <= budget_bytes:
            best = th
    return best


def rpn_head_forward(feature_nchw, params, *, tile_h=None):
    """feature_nchw: (N, C, H, W) float32. Returns (logits, deltas) in NCHW."""
    w1, b1 = params["w1"], params["b1"]
    wl, bl = params["wl"], params["bl"]
    wd, bd = params["wd"], params["bd"]
    N, C, H, W = feature_nchw.shape
    c_log = wl.shape[1]                    # 2A
    c_del = wd.shape[1]                    # 4A
    out_c = c_log + c_del                  # 6A
    out_c_pad = ((out_c + 127) // 128) * 128
    K3 = 3 * C

    if tile_h is None:
        tile_h = _choose_tile_h(H, W, C, out_c_pad)
    assert H % tile_h == 0, (H, tile_h)

    # --- wrapper-side layout prep (one fused XLA pass; replaces the old f32 pad copy) ---
    # NCHW -> NHWC + bf16; dx-im2col so x3[n, h, w, dx*C + c] = x[n, h, w - 1 + dx, c];
    # then pad H with one zero halo row top & bottom -> (N, H+2, W, 3C).
    x = jnp.transpose(feature_nchw, (0, 2, 3, 1)).astype(jnp.bfloat16)
    xw = jnp.pad(x, ((0, 0), (0, 0), (1, 1), (0, 0)))
    x3 = jnp.concatenate([xw[:, :, 0:W], xw[:, :, 1:W + 1], xw[:, :, 2:W + 2]], axis=-1)
    x3 = jnp.pad(x3, ((0, 0), (1, 1), (0, 0), (0, 0)))

    # conv1 weight (dy, dx, Cin, Cout) -> (dy, dx*Cin, Cout); heads fused and zero-padded.
    w1r = w1.reshape(3, K3, C).astype(jnp.bfloat16)
    b1r = b1.reshape(1, C).astype(jnp.float32)
    wh = jnp.pad(jnp.concatenate([wl, wd], axis=1),
                 ((0, 0), (0, out_c_pad - out_c))).astype(jnp.bfloat16)
    bh = jnp.pad(jnp.concatenate([bl, bd], axis=1),
                 ((0, 0), (0, out_c_pad - out_c))).astype(jnp.float32)

    kernel = functools.partial(_rpn_head_kernel, tile_h=tile_h, W=W, C=C,
                               out_c_pad=out_c_pad)

    out = pl.pallas_call(
        kernel,
        out_shape=jax.ShapeDtypeStruct((N, H, W, out_c_pad), jnp.float32),
        grid_spec=pltpu.PrefetchScalarGridSpec(
            num_scalar_prefetch=0,
            grid=(N, H // tile_h),
            in_specs=[
                pl.BlockSpec((1, tile_h, W, K3), lambda n, i: (n, i, 0, 0)),
                pl.BlockSpec((1, 1, W, K3),
                             lambda n, i: (n, i * tile_h + tile_h, 0, 0)),
                pl.BlockSpec((1, 1, W, K3),
                             lambda n, i: (n, i * tile_h + tile_h + 1, 0, 0)),
                pl.BlockSpec((3, K3, C), lambda n, i: (0, 0, 0)),
                pl.BlockSpec((1, C), lambda n, i: (0, 0)),
                pl.BlockSpec((C, out_c_pad), lambda n, i: (0, 0)),
                pl.BlockSpec((1, out_c_pad), lambda n, i: (0, 0)),
            ],
            out_specs=pl.BlockSpec((1, tile_h, W, out_c_pad),
                                   lambda n, i: (n, i, 0, 0)),
        ),
        compiler_params=pltpu.CompilerParams(
            dimension_semantics=("parallel", "parallel"),
            vmem_limit_bytes=32 * 1024 * 1024,
        ),
    )(x3, x3, x3, w1r, b1r, wh, bh)

    # Split the fused lane-dense slab back into the two heads; NHWC -> NCHW.
    logits = jnp.transpose(out[..., :c_log], (0, 3, 1, 2))
    deltas = jnp.transpose(out[..., c_log:out_c], (0, 3, 1, 2))
    return logits, deltas


def init_rpn_head_params(key, in_channel):
    """Deterministic synthetic init matching the PyTorch weight_init:
    all conv weights ~ N(0, 0.01^2), all biases = 0."""
    n_anchors = len(config.anchor_ratios) * len(config.anchor_scales)
    k1, k2, k3 = jax.random.split(key, 3)
    std = 0.01
    return {
        "w1": std * jax.random.normal(k1, (3, 3, in_channel, in_channel), jnp.float32),
        "b1": jnp.zeros((1, in_channel), jnp.float32),
        "wl": std * jax.random.normal(k2, (in_channel, n_anchors * 2), jnp.float32),
        "bl": jnp.zeros((1, n_anchors * 2), jnp.float32),
        "wd": std * jax.random.normal(k3, (in_channel, n_anchors * 4), jnp.float32),
        "bd": jnp.zeros((1, n_anchors * 4), jnp.float32),
    }


if __name__ == "__main__":
    key = jax.random.PRNGKey(0)
    k_x, k_p = jax.random.split(key)

    N, C, H, W = 2, 4, 16, 16
    x = jax.random.normal(k_x, (N, C, H, W), jnp.float32)
    params = init_rpn_head_params(k_p, C)

    # Default (auto-sized) tiling, plus an explicit smaller row tile that exercises
    # interior halo rows across tile boundaries.
    logits, deltas = jax.jit(rpn_head_forward)(x, params)
    logits_t, deltas_t = jax.jit(functools.partial(rpn_head_forward, tile_h=4))(x, params)
    jax.block_until_ready((logits, deltas, logits_t, deltas_t))

    n_anchors = len(config.anchor_ratios) * len(config.anchor_scales)
    assert logits.shape == (N, n_anchors * 2, H, W), logits.shape
    assert deltas.shape == (N, n_anchors * 4, H, W), deltas.shape

    # Plain-JAX f32 reference (lax.conv). The kernel uses bf16 MXU operands with f32
    # accumulation, so compare with a bf16-appropriate tolerance.
    w1_oihw = jnp.transpose(params["w1"], (3, 2, 0, 1))
    feat_ref = jax.lax.conv_general_dilated(
        x, w1_oihw, (1, 1), "SAME", dimension_numbers=("NCHW", "OIHW", "NCHW"))
    feat_ref = jnp.maximum(feat_ref + params["b1"].reshape(1, C, 1, 1), 0.0)
    wl_oihw = jnp.transpose(params["wl"], (1, 0))[:, :, None, None]
    wd_oihw = jnp.transpose(params["wd"], (1, 0))[:, :, None, None]
    logits_ref = jax.lax.conv_general_dilated(
        feat_ref, wl_oihw, (1, 1), "VALID",
        dimension_numbers=("NCHW", "OIHW", "NCHW")) + params["bl"].reshape(1, -1, 1, 1)
    deltas_ref = jax.lax.conv_general_dilated(
        feat_ref, wd_oihw, (1, 1), "VALID",
        dimension_numbers=("NCHW", "OIHW", "NCHW")) + params["bd"].reshape(1, -1, 1, 1)

    assert jnp.allclose(logits, logits_ref, atol=5e-4, rtol=2e-2), \
        float(jnp.max(jnp.abs(logits - logits_ref)))
    assert jnp.allclose(deltas, deltas_ref, atol=5e-4, rtol=2e-2), \
        float(jnp.max(jnp.abs(deltas - deltas_ref)))
    # Different spatial tilings must agree (validates the halo handling).
    assert jnp.allclose(logits, logits_t, atol=1e-6, rtol=1e-6)
    assert jnp.allclose(deltas, deltas_t, atol=1e-6, rtol=1e-6)

    print("KERNEL_OK")
</pallas_src>

<mosaic_0001>
module attributes {stable_mosaic.version = 11 : i64} {
  func.func @_rpn_head_kernel(%arg0: i32, %arg1: i32, %arg2: memref<1x16x16x12xbf16, #tpu.memory_space<vmem>>, %arg3: memref<1x1x16x12xbf16, #tpu.memory_space<vmem>>, %arg4: memref<1x1x16x12xbf16, #tpu.memory_space<vmem>>, %arg5: memref<3x12x4xbf16, #tpu.memory_space<vmem>>, %arg6: memref<1x4xf32, #tpu.memory_space<vmem>>, %arg7: memref<4x128xbf16, #tpu.memory_space<vmem>>, %arg8: memref<1x128xf32, #tpu.memory_space<vmem>>, %arg9: memref<1x16x16x128xf32, #tpu.memory_space<vmem>>) attributes {dimension_semantics = [#tpu.dimension_semantics<parallel>, #tpu.dimension_semantics<parallel>], iteration_bounds = array<i64: 2, 1>, scalar_prefetch = 0 : i64, scratch_operands = 0 : i64, tpu.core_type = #tpu.core_type<tc>, window_params = [{transform_indices = @transform_0, window_bounds = array<i64: 1, 16, 16, 12>}, {transform_indices = @transform_1, window_bounds = array<i64: 1, 1, 16, 12>}, {transform_indices = @transform_2, window_bounds = array<i64: 1, 1, 16, 12>}, {pipeline_mode = #tpu.pipeline_mode<synchronous>, transform_indices = @transform_3, window_bounds = array<i64: 3, 12, 4>}, {pipeline_mode = #tpu.pipeline_mode<synchronous>, transform_indices = @transform_4, window_bounds = array<i64: 1, 4>}, {pipeline_mode = #tpu.pipeline_mode<synchronous>, transform_indices = @transform_5, window_bounds = array<i64: 4, 128>}, {pipeline_mode = #tpu.pipeline_mode<synchronous>, transform_indices = @transform_6, window_bounds = array<i64: 1, 128>}, {transform_indices = @transform_7, window_bounds = array<i64: 1, 16, 16, 128>}]} {
    %c0 = arith.constant 0 : index
    %c0_0 = arith.constant 0 : index
    %c0_1 = arith.constant 0 : index
    %c0_2 = arith.constant 0 : index
    %0 = vector.load %arg2[%c0, %c0_0, %c0_1, %c0_2] : memref<1x16x16x12xbf16, #tpu.memory_space<vmem>>, vector<1x16x16x12xbf16>
    %1 = vector.shape_cast %0 : vector<1x16x16x12xbf16> to vector<16x16x12xbf16>
    %c0_3 = arith.constant 0 : index
    %c0_4 = arith.constant 0 : index
    %c0_5 = arith.constant 0 : index
    %c0_6 = arith.constant 0 : index
    %2 = vector.load %arg3[%c0_3, %c0_4, %c0_5, %c0_6] : memref<1x1x16x12xbf16, #tpu.memory_space<vmem>>, vector<1x1x16x12xbf16>
    %3 = vector.shape_cast %2 : vector<1x1x16x12xbf16> to vector<1x16x12xbf16>
    %c0_7 = arith.constant 0 : index
    %c0_8 = arith.constant 0 : index
    %c0_9 = arith.constant 0 : index
    %c0_10 = arith.constant 0 : index
    %4 = vector.load %arg4[%c0_7, %c0_8, %c0_9, %c0_10] : memref<1x1x16x12xbf16, #tpu.memory_space<vmem>>, vector<1x1x16x12xbf16>
    %5 = vector.shape_cast %4 : vector<1x1x16x12xbf16> to vector<1x16x12xbf16>
    %6 = tpu.concatenate %1, %3, %5 in 0 : vector<16x16x12xbf16>, vector<1x16x12xbf16>, vector<1x16x12xbf16> -> vector<18x16x12xbf16>
    %cst = arith.constant 0.000000e+00 : f32
    %7 = vector.broadcast %cst : f32 to vector<256x4xf32>
    %8 = vector.extract_strided_slice %6 {offsets = [0, 0, 0], sizes = [16, 16, 12], strides = [1, 1, 1]} : vector<18x16x12xbf16> to vector<16x16x12xbf16>
    %9 = vector.shape_cast %8 : vector<16x16x12xbf16> to vector<256x12xbf16>
    %c0_11 = arith.constant 0 : index
    %c0_12 = arith.constant 0 : index
    %c0_13 = arith.constant 0 : index
    %10 = vector.load %arg5[%c0_11, %c0_12, %c0_13] : memref<3x12x4xbf16, #tpu.memory_space<vmem>>, vector<1x12x4xbf16>
    %11 = vector.shape_cast %10 : vector<1x12x4xbf16> to vector<12x4xbf16>
    %cst_14 = arith.constant dense<0.000000e+00> : vector<256x4xf32>
    %12 = tpu.matmul %9, %11, %cst_14 {dimension_numbers = #tpu.dot_dimension_numbers<[1], [0], [0], [1], [0, 0, 1, 1], [], []>} : vector<256x12xbf16>, vector<12x4xbf16>, vector<256x4xf32> -> vector<256x4xf32>
    %13 = arith.addf %7, %12 : vector<256x4xf32>
    %14 = vector.extract_strided_slice %6 {offsets = [1, 0, 0], sizes = [16, 16, 12], strides = [1, 1, 1]} : vector<18x16x12xbf16> to vector<16x16x12xbf16>
    %15 = vector.shape_cast %14 : vector<16x16x12xbf16> to vector<256x12xbf16>
    %c1 = arith.constant 1 : index
    %c0_15 = arith.constant 0 : index
    %c0_16 = arith.constant 0 : index
    %16 = vector.load %arg5[%c1, %c0_15, %c0_16] : memref<3x12x4xbf16, #tpu.memory_space<vmem>>, vector<1x12x4xbf16>
    %17 = vector.shape_cast %16 : vector<1x12x4xbf16> to vector<12x4xbf16>
    %cst_17 = arith.constant dense<0.000000e+00> : vector<256x4xf32>
    %18 = tpu.matmul %15, %17, %cst_17 {dimension_numbers = #tpu.dot_dimension_numbers<[1], [0], [0], [1], [0, 0, 1, 1], [], []>} : vector<256x12xbf16>, vector<12x4xbf16>, vector<256x4xf32> -> vector<256x4xf32>
    %19 = arith.addf %13, %18 : vector<256x4xf32>
    %20 = vector.extract_strided_slice %6 {offsets = [2, 0, 0], sizes = [16, 16, 12], strides = [1, 1, 1]} : vector<18x16x12xbf16> to vector<16x16x12xbf16>
    %21 = vector.shape_cast %20 : vector<16x16x12xbf16> to vector<256x12xbf16>
    %c2 = arith.constant 2 : index
    %c0_18 = arith.constant 0 : index
    %c0_19 = arith.constant 0 : index
    %22 = vector.load %arg5[%c2, %c0_18, %c0_19] : memref<3x12x4xbf16, #tpu.memory_space<vmem>>, vector<1x12x4xbf16>
    %23 = vector.shape_cast %22 : vector<1x12x4xbf16> to vector<12x4xbf16>
    %cst_20 = arith.constant dense<0.000000e+00> : vector<256x4xf32>
    %24 = tpu.matmul %21, %23, %cst_20 {dimension_numbers = #tpu.dot_dimension_numbers<[1], [0], [0], [1], [0, 0, 1, 1], [], []>} : vector<256x12xbf16>, vector<12x4xbf16>, vector<256x4xf32> -> vector<256x4xf32>
    %25 = arith.addf %19, %24 : vector<256x4xf32>
    %c0_21 = arith.constant 0 : index
    %c0_22 = arith.constant 0 : index
    %26 = vector.load %arg6[%c0_21, %c0_22] : memref<1x4xf32, #tpu.memory_space<vmem>>, vector<1x4xf32>
    %27 = vector.broadcast %26 : vector<1x4xf32> to vector<256x4xf32>
    %28 = arith.addf %25, %27 : vector<256x4xf32>
    %cst_23 = arith.constant 0.000000e+00 : f32
    %29 = vector.broadcast %cst_23 : f32 to vector<256x4xf32>
    %30 = arith.maximumf %28, %29 : vector<256x4xf32>
    %31 = arith.truncf %30 : vector<256x4xf32> to vector<256x4xbf16>
    %c0_24 = arith.constant 0 : index
    %c0_25 = arith.constant 0 : index
    %32 = vector.load %arg7[%c0_24, %c0_25] : memref<4x128xbf16, #tpu.memory_space<vmem>>, vector<4x128xbf16>
    %cst_26 = arith.constant dense<0.000000e+00> : vector<256x128xf32>
    %33 = tpu.matmul %31, %32, %cst_26 {dimension_numbers = #tpu.dot_dimension_numbers<[1], [0], [0], [1], [0, 0, 1, 1], [], []>} : vector<256x4xbf16>, vector<4x128xbf16>, vector<256x128xf32> -> vector<256x128xf32>
    %c0_27 = arith.constant 0 : index
    %c0_28 = arith.constant 0 : index
    %34 = vector.load %arg8[%c0_27, %c0_28] : memref<1x128xf32, #tpu.memory_space<vmem>>, vector<1x128xf32>
    %35 = vector.broadcast %34 : vector<1x128xf32> to vector<256x128xf32>
    %36 = arith.addf %33, %35 : vector<256x128xf32>
    %37 = vector.shape_cast %36 : vector<256x128xf32> to vector<1x16x16x128xf32>
    %c0_29 = arith.constant 0 : index
    %c0_30 = arith.constant 0 : index
    %c0_31 = arith.constant 0 : index
    %c0_32 = arith.constant 0 : index
    %38 = vector.load %arg9[%c0_29, %c0_30, %c0_31, %c0_32] : memref<1x16x16x128xf32, #tpu.memory_space<vmem>>, vector<1x16x16x128xf32>
    tpu.vector_store %arg9[%c0_29, %c0_30, %c0_31, %c0_32], %37 {strides = array<i32>} : memref<1x16x16x128xf32, #tpu.memory_space<vmem>>, vector<1x16x16x128xf32>,
    return
  }
  func.func @transform_0(%arg0: i32, %arg1: i32) -> (i32, i32, i32, i32) {
    %c0_i32 = arith.constant 0 : i32
    %c0_i32_0 = arith.constant 0 : i32
    %c0_i32_1 = arith.constant 0 : i32
    return %arg0, %arg1, %c0_i32, %c0_i32_0 : i32, i32, i32, i32
  }
  func.func @transform_1(%arg0: i32, %arg1: i32) -> (i32, i32, i32, i32) {
    %c16_i32 = arith.constant 16 : i32
    %0 = arith.muli %arg1, %c16_i32 : i32
    %c16_i32_0 = arith.constant 16 : i32
    %1 = arith.addi %0, %c16_i32_0 : i32
    %c0_i32 = arith.constant 0 : i32
    %c0_i32_1 = arith.constant 0 : i32
    %c0_i32_2 = arith.constant 0 : i32
    return %arg0, %1, %c0_i32, %c0_i32_1 : i32, i32, i32, i32
  }
  func.func @transform_2(%arg0: i32, %arg1: i32) -> (i32, i32, i32, i32) {
    %c16_i32 = arith.constant 16 : i32
    %0 = arith.muli %arg1, %c16_i32 : i32
    %c16_i32_0 = arith.constant 16 : i32
    %1 = arith.addi %0, %c16_i32_0 : i32
    %c1_i32 = arith.constant 1 : i32
    %2 = arith.addi %1, %c1_i32 : i32
    %c0_i32 = arith.constant 0 : i32
    %c0_i32_1 = arith.constant 0 : i32
    %c0_i32_2 = arith.constant 0 : i32
    return %arg0, %2, %c0_i32, %c0_i32_1 : i32, i32, i32, i32
  }
  func.func @transform_3(%arg0: i32, %arg1: i32) -> (i32, i32, i32) {
    %c0_i32 = arith.constant 0 : i32
    %c0_i32_0 = arith.constant 0 : i32
    %c0_i32_1 = arith.constant 0 : i32
    %c0_i32_2 = arith.constant 0 : i32
    return %c0_i32, %c0_i32_0, %c0_i32_1 : i32, i32, i32
  }
  func.func @transform_4(%arg0: i32, %arg1: i32) -> (i32, i32) {
    %c0_i32 = arith.constant 0 : i32
    %c0_i32_0 = arith.constant 0 : i32
    %c0_i32_1 = arith.constant 0 : i32
    return %c0_i32, %c0_i32_0 : i32, i32
  }
  func.func @transform_5(%arg0: i32, %arg1: i32) -> (i32, i32) {
    %c0_i32 = arith.constant 0 : i32
    %c0_i32_0 = arith.constant 0 : i32
    %c0_i32_1 = arith.constant 0 : i32
    return %c0_i32, %c0_i32_0 : i32, i32
  }
  func.func @transform_6(%arg0: i32, %arg1: i32) -> (i32, i32) {
    %c0_i32 = arith.constant 0 : i32
    %c0_i32_0 = arith.constant 0 : i32
    %c0_i32_1 = arith.constant 0 : i32
    return %c0_i32, %c0_i32_0 : i32, i32
  }
  func.func @transform_7(%arg0: i32, %arg1: i32) -> (i32, i32, i32, i32) {
    %c0_i32 = arith.constant 0 : i32
    %c0_i32_0 = arith.constant 0 : i32
    %c0_i32_1 = arith.constant 0 : i32
    return %arg0, %arg1, %c0_i32, %c0_i32_0 : i32, i32, i32, i32
  }
}

</mosaic_0001>

<llo_original>
// kernel: rpn_head_forward.1
$region0: #{rpn_head_forward.1}
  #allocation0 [shape = 'u32[]', space=smem, size = 0x4, offset = 0x4, fixed_abs, tag = 'smem constant byte address 0x4 - core index']
  #allocation1 [shape = 'u32[144,128]{1,0:T(1,128)}', space=vmem, size = 0x12000, scoped, tag = 'internal scratch']
  %s0 = inlined_call_operand.vmem [shape: bf16[2,18,16,12], index: 0, kind: input, shape index: {}, may-alias: {0,1,2}]
  %s1 = inlined_call_operand.vmem [shape: bf16[2,18,16,12], index: 1, kind: input, shape index: {}, may-alias: {0,1,2}]
  %s2 = inlined_call_operand.vmem [shape: bf16[2,18,16,12], index: 2, kind: input, shape index: {}, may-alias: {0,1,2}]
  %s3 = inlined_call_operand.vmem [shape: bf16[3,12,4], index: 3, kind: input, shape index: {}]
  %s4 = inlined_call_operand.vmem [shape: f32[1,4], index: 4, kind: input, shape index: {}]
  %s5 = inlined_call_operand.vmem [shape: bf16[4,128], index: 5, kind: input, shape index: {}]
  %s6 = inlined_call_operand.vmem [shape: f32[1,128], index: 6, kind: input, shape index: {}]
  %s7 = inlined_call_operand.vmem [shape: f32[2,16,16,128], index: 7, kind: output, shape index: {}]
  %s8 = sld [smem:[#allocation0]]
  $region61: #{rpn_head_forward.1} parent=0
    _
  %s10 = ssub.s32 1, %s8
  %s11 = scalar_select 0, %s10, %s8
  loop: start=0, step=1, limit=4
  $region2: #{rpn_head_forward.1} parent=0 // loop_pre_header
    _
  $region3: #{rpn_head_forward.1} parent=0 // loop_header
    %s13 = sphi 0, %s17
    %p14 = scmp.ge.s32.totalorder %s13, 4
    %s20 = sphi 0, %s32
    %s21 = sphi 0, %s28
    %s22 = sphi 0, %s20
    %s23 = sphi 0, %s21
    %s24 = sphi 0, %s22
    %s25 = sphi 0, %s23
    %s37 = sphi 0, %s39
    %s40 = sphi 0, %s37
    %s41 = sphi 0, %s40
    %s57 = sphi 0, %s41
    %s69 = sphi 0, %s71
    %s72 = sphi 0, %s69
    %s73 = sphi 0, %s72
    %s89 = sphi 0, %s73
    %s101 = sphi 0, %s103
    %s104 = sphi 0, %s101
    %s105 = sphi 0, %s104
    %s121 = sphi 0, %s105
    %s125 = sphi 0, %s125
    %s127 = sphi 0, %s125
    %s128 = sphi 0, %s127
    %s142 = sphi 0, %s128
    %s146 = sphi 0, %s146
    %s148 = sphi 0, %s146
    %s149 = sphi 0, %s148
    %s163 = sphi 0, %s149
    %s167 = sphi 0, %s167
    %s169 = sphi 0, %s167
    %s170 = sphi 0, %s169
    %s184 = sphi 0, %s170
    %s188 = sphi 0, %s188
    %s190 = sphi 0, %s188
    %s191 = sphi 0, %s190
    %s205 = sphi 0, %s191
    %s213 = sphi 0, %s215
    %s216 = sphi 0, %s213
    %s217 = sphi 0, %s216
    %s233 = sphi 0, %s217
  $region4: #{rpn_head_forward.1} parent=0 // loop_header_branch
    %16 = sbr.rel (%p14) target = $region8
  $region5: #{rpn_head_forward.1} parent=0 // loop_body
    %s18 = ssub.s32 %s13, 1
    %s19 = ssub.s32 %s13, 2
    %s26 = sadd.s32 1, %s21
    %p27 = scmp.ge.s32.totalorder %s26, 1
    %s28 = scalar_select %p27, 0, %s26
    %s29 = sadd.s32 1, %s20
    %s30 = scalar_select %p27, %s29, %s20
    %p31 = scmp.ge.s32.totalorder %s30, 2
    %s32 = scalar_select %p31, 0, %s30
    %s33 = ssub.s32 %s20, %s32
    %s34 = ssub.s32 %s21, %s28
    %s35 = sor.u32 %s33, %s34
    %p36 = scmp.eq.s32.totalorder %s35, 0
    %s38 = sadd.s32 %s37, 1
    %s39 = scalar_select %p36, %s37, %s38
    %p42 = pneg %p36
    %p43 = scmp.eq.s32.totalorder %s13, 1
    %p44 = por %p42, %p43
    %p45 = scmp.ne.s32.totalorder %s37, %s40
    %p46 = scmp.eq.s32.totalorder %s13, 0
    %p47 = por %p45, %p46
    %p48 = scmp.ne.s32.totalorder %s37, %s40
    %p49 = scmp.eq.s32.totalorder %s18, 1
    %p50 = por %p48, %p49
    %p51 = scmp.ne.s32.totalorder %s40, %s41
    %p52 = scmp.eq.s32.totalorder %s18, 0
    %p53 = por %p51, %p52
    %p54 = scmp.ne.s32.totalorder %s40, %s41
    %p55 = scmp.eq.s32.totalorder %s19, 1
    %p56 = por %p54, %p55
    %p58 = scmp.ne.s32.totalorder %s41, %s57
    %p59 = scmp.eq.s32.totalorder %s19, 0
    %p60 = por %p58, %p59
    %s61 = smul.u32 %s21, 16
    %s62 = sadd.s32 %s61, 16
    %s63 = smul.u32 %s28, 16
    %s64 = sadd.s32 %s63, 16
    %s65 = ssub.s32 %s20, %s32
    %s66 = ssub.s32 %s62, %s64
    %s67 = sor.u32 %s65, %s66
    %p68 = scmp.eq.s32.totalorder %s67, 0
    %s70 = sadd.s32 %s69, 1
    %s71 = scalar_select %p68, %s69, %s70
    %p74 = pneg %p68
    %p75 = scmp.eq.s32.totalorder %s13, 1
    %p76 = por %p74, %p75
    %p77 = scmp.ne.s32.totalorder %s69, %s72
    %p78 = scmp.eq.s32.totalorder %s13, 0
    %p79 = por %p77, %p78
    %p80 = scmp.ne.s32.totalorder %s69, %s72
    %p81 = scmp.eq.s32.totalorder %s18, 1
    %p82 = por %p80, %p81
    %p83 = scmp.ne.s32.totalorder %s72, %s73
    %p84 = scmp.eq.s32.totalorder %s18, 0
    %p85 = por %p83, %p84
    %p86 = scmp.ne.s32.totalorder %s72, %s73
    %p87 = scmp.eq.s32.totalorder %s19, 1
    %p88 = por %p86, %p87
    %p90 = scmp.ne.s32.totalorder %s73, %s89
    %p91 = scmp.eq.s32.totalorder %s19, 0
    %p92 = por %p90, %p91
    %s93 = smul.u32 %s21, 16
    %s94 = sadd.s32 %s93, 17
    %s95 = smul.u32 %s28, 16
    %s96 = sadd.s32 %s95, 17
    %s97 = ssub.s32 %s20, %s32
    %s98 = ssub.s32 %s94, %s96
    %s99 = sor.u32 %s97, %s98
    %p100 = scmp.eq.s32.totalorder %s99, 0
    %s102 = sadd.s32 %s101, 1
    %s103 = scalar_select %p100, %s101, %s102
    %p106 = pneg %p100
    %p107 = scmp.eq.s32.totalorder %s13, 1
    %p108 = por %p106, %p107
    %p109 = scmp.ne.s32.totalorder %s101, %s104
    %p110 = scmp.eq.s32.totalorder %s13, 0
    %p111 = por %p109, %p110
    %p112 = scmp.ne.s32.totalorder %s101, %s104
    %p113 = scmp.eq.s32.totalorder %s18, 1
    %p114 = por %p112, %p113
    %p115 = scmp.ne.s32.totalorder %s104, %s105
    %p116 = scmp.eq.s32.totalorder %s18, 0
    %p117 = por %p115, %p116
    %p118 = scmp.ne.s32.totalorder %s104, %s105
    %p119 = scmp.eq.s32.totalorder %s19, 1
    %p120 = por %p118, %p119
    %p122 = scmp.ne.s32.totalorder %s105, %s121
    %p123 = scmp.eq.s32.totalorder %s19, 0
    %p124 = por %p122, %p123
    %s126 = sadd.s32 %s125, 1
    %p129 = scmp.eq.s32.totalorder %s13, 1
    %p130 = scmp.ne.s32.totalorder %s125, %s127
    %p131 = scmp.eq.s32.totalorder %s13, 0
    %p132 = por %p130, %p131
    %p133 = scmp.ne.s32.totalorder %s125, %s127
    %p134 = scmp.eq.s32.totalorder %s18, 1
    %p135 = por %p133, %p134
    %p136 = scmp.ne.s32.totalorder %s127, %s128
    %p137 = scmp.eq.s32.totalorder %s18, 0
    %p138 = por %p136, %p137
    %p139 = scmp.ne.s32.totalorder %s127, %s128
    %p140 = scmp.eq.s32.totalorder %s19, 1
    %p141 = por %p139, %p140
    %p143 = scmp.ne.s32.totalorder %s128, %s142
    %p144 = scmp.eq.s32.totalorder %s19, 0
    %p145 = por %p143, %p144
    %s147 = sadd.s32 %s146, 1
    %p150 = scmp.eq.s32.totalorder %s13, 1
    %p151 = scmp.ne.s32.totalorder %s146, %s148
    %p152 = scmp.eq.s32.totalorder %s13, 0
    %p153 = por %p151, %p152
    %p154 = scmp.ne.s32.totalorder %s146, %s148
    %p155 = scmp.eq.s32.totalorder %s18, 1
    %p156 = por %p154, %p155
    %p157 = scmp.ne.s32.totalorder %s148, %s149
    %p158 = scmp.eq.s32.totalorder %s18, 0
    %p159 = por %p157, %p158
    %p160 = scmp.ne.s32.totalorder %s148, %s149
    %p161 = scmp.eq.s32.totalorder %s19, 1
    %p162 = por %p160, %p161
    %p164 = scmp.ne.s32.totalorder %s149, %s163
    %p165 = scmp.eq.s32.totalorder %s19, 0
    %p166 = por %p164, %p165
    %s168 = sadd.s32 %s167, 1
    %p171 = scmp.eq.s32.totalorder %s13, 1
    %p172 = scmp.ne.s32.totalorder %s167, %s169
    %p173 = scmp.eq.s32.totalorder %s13, 0
    %p174 = por %p172, %p173
    %p175 = scmp.ne.s32.totalorder %s167, %s169
    %p176 = scmp.eq.s32.totalorder %s18, 1
    %p177 = por %p175, %p176
    %p178 = scmp.ne.s32.totalorder %s169, %s170
    %p179 = scmp.eq.s32.totalorder %s18, 0
    %p180 = por %p178, %p179
    %p181 = scmp.ne.s32.totalorder %s169, %s170
    %p182 = scmp.eq.s32.totalorder %s19, 1
    %p183 = por %p181, %p182
    %p185 = scmp.ne.s32.totalorder %s170, %s184
    %p186 = scmp.eq.s32.totalorder %s19, 0
    %p187 = por %p185, %p186
    %s189 = sadd.s32 %s188, 1
    %p192 = scmp.eq.s32.totalorder %s13, 1
    %p193 = scmp.ne.s32.totalorder %s188, %s190
    %p194 = scmp.eq.s32.totalorder %s13, 0
    %p195 = por %p193, %p194
    %p196 = scmp.ne.s32.totalorder %s188, %s190
    %p197 = scmp.eq.s32.totalorder %s18, 1
    %p198 = por %p196, %p197
    %p199 = scmp.ne.s32.totalorder %s190, %s191
    %p200 = scmp.eq.s32.totalorder %s18, 0
    %p201 = por %p199, %p200
    %p202 = scmp.ne.s32.totalorder %s190, %s191
    %p203 = scmp.eq.s32.totalorder %s19, 1
    %p204 = por %p202, %p203
    %p206 = scmp.ne.s32.totalorder %s191, %s205
    %p207 = scmp.eq.s32.totalorder %s19, 0
    %p208 = por %p206, %p207
    %s209 = ssub.s32 %s20, %s32
    %s210 = ssub.s32 %s21, %s28
    %s211 = sor.u32 %s209, %s210
    %p212 = scmp.eq.s32.totalorder %s211, 0
    %s214 = sadd.s32 %s213, 1
    %s215 = scalar_select %p212, %s213, %s214
    %p218 = pneg %p212
    %p219 = scmp.eq.s32.totalorder %s13, 1
    %p220 = por %p218, %p219
    %p221 = scmp.ne.s32.totalorder %s213, %s216
    %p222 = scmp.eq.s32.totalorder %s13, 0
    %p223 = por %p221, %p222
    %p224 = scmp.ne.s32.totalorder %s213, %s216
    %p225 = scmp.eq.s32.totalorder %s18, 1
    %p226 = por %p224, %p225
    %p227 = scmp.ne.s32.totalorder %s216, %s217
    %p228 = scmp.eq.s32.totalorder %s18, 0
    %p229 = por %p227, %p228
    %p230 = scmp.ne.s32.totalorder %s216, %s217
    %p231 = scmp.eq.s32.totalorder %s19, 1
    %p232 = por %p230, %p231
    %p234 = scmp.ne.s32.totalorder %s217, %s233
    %p235 = scmp.eq.s32.totalorder %s19, 0
    %p236 = por %p234, %p235
    %p237 = scmp.le.s32.totalorder 1, %s13
    %p238 = scmp.lt.s32.totalorder %s13, 3
    %p239 = pnand %p237, %p238
    %p240 = pneg %p239
    // Predicated region
    $region9: #{rpn_head_forward.1} parent=5 // pred_check
      _
    $region10: #{rpn_head_forward.1} parent=5 // pred_check_branch
      %242 = sbr.rel (%p239) target = $region12
    $region11: #{rpn_head_forward.1} parent=5 // pred_region
      %s243 = ssub.s32 %s13, 1
      // Predicated region
      $region13: #{rpn_head_forward.1} parent=11 // pred_check
        %p244 = pneg %p138
      $region14: #{rpn_head_forward.1} parent=11 // pred_check_branch
        %246 = sbr.rel (%p244) target = $region16
      $region15: #{rpn_head_forward.1} parent=11 // pred_region
        _
      $region16: #{rpn_head_forward.1} parent=11 // pred_fallthru
        _
      // Predicated region
      $region17: #{rpn_head_forward.1} parent=11 // pred_check
        %p247 = pneg %p159
      $region18: #{rpn_head_forward.1} parent=11 // pred_check_branch
        %249 = sbr.rel (%p247) target = $region20
      $region19: #{rpn_head_forward.1} parent=11 // pred_region
        _
      $region20: #{rpn_head_forward.1} parent=11 // pred_fallthru
        _
      // Predicated region
      $region21: #{rpn_head_forward.1} parent=11 // pred_check
        %p250 = pneg %p180
      $region22: #{rpn_head_forward.1} parent=11 // pred_check_branch
        %252 = sbr.rel (%p250) target = $region24
      $region23: #{rpn_head_forward.1} parent=11 // pred_region
        _
      $region24: #{rpn_head_forward.1} parent=11 // pred_fallthru
        _
      // Predicated region
      $region25: #{rpn_head_forward.1} parent=11 // pred_check
        %p253 = pneg %p201
      $region26: #{rpn_head_forward.1} parent=11 // pred_check_branch
        %255 = sbr.rel (%p253) target = $region28
      $region27: #{rpn_head_forward.1} parent=11 // pred_region
        _
      $region28: #{rpn_head_forward.1} parent=11 // pred_fallthru
        _
    $region12: #{rpn_head_forward.1} parent=5 // pred_fallthru
      _
    %p256 = scmp.lt.s32.totalorder %s13, 2
    // Predicated region
    $region29: #{rpn_head_forward.1} parent=5 // pred_check
      %p257 = pneg %p256
    $region30: #{rpn_head_forward.1} parent=5 // pred_check_branch
      %259 = sbr.rel (%p257) target = $region32
    $region31: #{rpn_head_forward.1} parent=5 // pred_region
      // Predicated region
      $region33: #{rpn_head_forward.1} parent=31 // pred_check
        %p260 = pneg %p47
      $region34: #{rpn_head_forward.1} parent=31 // pred_check_branch
        %262 = sbr.rel (%p260) target = $region36
      $region35: #{rpn_head_forward.1} parent=31 // pred_region
        %s263 = smul.u32 16, %s21
        %s264 = ssub.s32 18, %s263
        %p265 = scmp.lt.s32.totalorder %s264, 16
        %s266 = scalar_select %p265, %s264, 16
        %s267 = smul.u32 64, %s266
        %s268 = smul.u32 %s267, 2
        %p269 = scmp.lt.s32.totalorder %s20, 1
        %s270 = scalar_select %p269, %s20, 1
        %p271 = scmp.lt.s32.totalorder %s263, 17
        %s272 = scalar_select %p271, %s263, 17
        %s273 = smul.addr %s272, 2
        %s274 = smul.addr %s270, 36
        %s275 = sadd.s32 %s273, %s274
        %s276 = smul.addr %s275, 4
        %s277 = scalar_lea.vmem %s0, %s276
        %s278 = smul.u32 16, %s21
        %s279 = ssub.s32 18, %s278
        %p280 = scmp.lt.s32.totalorder %s279, 16
        %s281 = scalar_select %p280, %s279, 16
        %s282 = smul.u32 64, %s281
        %s283 = smul.u32 %s282, 2
      $region36: #{rpn_head_forward.1} parent=31 // pred_fallthru
        _
      // Predicated region
      $region37: #{rpn_head_forward.1} parent=31 // pred_check
        %p284 = pneg %p79
      $region38: #{rpn_head_forward.1} parent=31 // pred_check_branch
        %286 = sbr.rel (%p284) target = $region40
      $region39: #{rpn_head_forward.1} parent=31 // pred_region
        %s287 = smul.u32 %s21, 16
        %s288 = sadd.s32 %s287, 16
        %p289 = scmp.lt.s32.totalorder %s20, 1
        %s290 = scalar_select %p289, %s20, 1
        %p291 = scmp.lt.s32.totalorder %s288, 17
        %s292 = scalar_select %p291, %s288, 17
        %s293 = smul.addr %s292, 2
        %s294 = smul.addr %s290, 36
        %s295 = sadd.s32 %s293, %s294
        %s296 = smul.addr %s295, 4
        %s297 = scalar_lea.vmem %s1, %s296
        %s298 = smul.u32 %s21, 16
        %s299 = sadd.s32 %s298, 16
      $region40: #{rpn_head_forward.1} parent=31 // pred_fallthru
        _
      // Predicated region
      $region41: #{rpn_head_forward.1} parent=31 // pred_check
        %p300 = pneg %p111
      $region42: #{rpn_head_forward.1} parent=31 // pred_check_branch
        %302 = sbr.rel (%p300) target = $region44
      $region43: #{rpn_head_forward.1} parent=31 // pred_region
        %s303 = smul.u32 %s21, 16
        %s304 = sadd.s32 %s303, 17
        %p305 = scmp.lt.s32.totalorder %s20, 1
        %s306 = scalar_select %p305, %s20, 1
        %p307 = scmp.lt.s32.totalorder %s304, 17
        %s308 = scalar_select %p307, %s304, 17
        %s309 = smul.addr %s308, 2
        %s310 = smul.addr %s306, 36
        %s311 = sadd.s32 %s309, %s310
        %s312 = smul.addr %s311, 4
        %s313 = scalar_lea.vmem %s2, %s312
        %s314 = smul.u32 %s21, 16
        %s315 = sadd.s32 %s314, 17
      $region44: #{rpn_head_forward.1} parent=31 // pred_fallthru
        _
    $region32: #{rpn_head_forward.1} parent=5 // pred_fallthru
      _
    %p316 = scmp.le.s32.totalorder 1, %s13
    %p317 = scmp.lt.s32.totalorder %s13, 3
    %p318 = pnand %p316, %p317
    %p319 = pneg %p318
    // Predicated region
    $region45: #{rpn_head_forward.1} parent=5 // pred_check
      _
    $region46: #{rpn_head_forward.1} parent=5 // pred_check_branch
      %321 = sbr.rel (%p318) target = $region48
    $region47: #{rpn_head_forward.1} parent=5 // pred_region
      %s322 = ssub.s32 %s13, 1
      %s323 = smul.u32 16, %s23
      %s324 = ssub.s32 18, %s323
      %p325 = scmp.lt.s32.totalorder %s324, 16
      %s326 = scalar_select %p325, %s324, 16
      %s327 = smul.u32 64, %s326
      %s328 = smul.u32 %s327, 2
      %p329 = scmp.lt.s32.totalorder %s22, 1
      %s330 = scalar_select %p329, %s22, 1
      %p331 = scmp.lt.s32.totalorder %s323, 17
      %s332 = scalar_select %p331, %s323, 17
      %s333 = smul.addr %s332, 2
      %s334 = smul.addr %s330, 36
      %s335 = sadd.s32 %s333, %s334
      %s336 = smul.addr %s335, 4
      %s337 = scalar_lea.vmem %s0, %s336
      %p338 = pneg %p53
      %p339 = pneg %p50
      %s340 = smul.u32 %s23, 16
      %s341 = sadd.s32 %s340, 16
      %p342 = scmp.lt.s32.totalorder %s22, 1
      %s343 = scalar_select %p342, %s22, 1
      %p344 = scmp.lt.s32.totalorder %s341, 17
      %s345 = scalar_select %p344, %s341, 17
      %s346 = smul.addr %s345, 2
      %s347 = smul.addr %s343, 36
      %s348 = sadd.s32 %s346, %s347
      %s349 = smul.addr %s348, 4
      %s350 = scalar_lea.vmem %s1, %s349
      %p351 = pneg %p85
      %p352 = pneg %p82
      %s353 = smul.u32 %s23, 16
      %s354 = sadd.s32 %s353, 17
      %p355 = scmp.lt.s32.totalorder %s22, 1
      %s356 = scalar_select %p355, %s22, 1
      %p357 = scmp.lt.s32.totalorder %s354, 17
      %s358 = scalar_select %p357, %s354, 17
      %s359 = smul.addr %s358, 2
      %s360 = smul.addr %s356, 36
      %s361 = sadd.s32 %s359, %s360
      %s362 = smul.addr %s361, 4
      %s363 = scalar_lea.vmem %s2, %s362
      %p364 = pneg %p117
      %p365 = pneg %p114
      %p366 = pneg %p138
      %p367 = pneg %p135
      %p368 = pneg %p159
      %p369 = pneg %p156
      %p370 = pneg %p180
      %p371 = pneg %p177
      %p372 = pneg %p201
      %p373 = pneg %p198
      %p374 = pneg %p229
      %p375 = pneg %p226
      %s376 = smul.u32 16, %s23
      %p377 = scmp.lt.s32.totalorder %s22, 1
      %s378 = scalar_select %p377, %s22, 1
      %p379 = scmp.lt.s32.totalorder %s376, 15
      %s380 = scalar_select %p379, %s376, 15
      %s381 = smul.addr %s380, 2
      %s382 = smul.addr %s378, 32
      %s383 = sadd.s32 %s381, %s382
      %s384 = smul.addr %s383, 8
      %s385 = scalar_lea.vmem %s7, %s384
      %s386 = smul.u32 16, %s23
      %s387 = ssub.s32 18, %s386
      %p388 = scmp.lt.s32.totalorder %s387, 16
      %s389 = scalar_select %p388, %s387, 16
      %s390 = smul.u32 64, %s389
      %s391 = smul.u32 %s390, 2
      %p392 = scmp.lt.s32.totalorder %s22, 1
      %s393 = scalar_select %p392, %s22, 1
      %p394 = scmp.lt.s32.totalorder %s386, 17
      %s395 = scalar_select %p394, %s386, 17
      %s396 = smul.addr %s395, 2
      %s397 = smul.addr %s393, 36
      %s398 = sadd.s32 %s396, %s397
      %s399 = smul.addr %s398, 4
      %s400 = scalar_lea.vmem %s0, %s399
      %s401 = smul.u32 16, %s23
      %s402 = ssub.s32 18, %s401
      %p403 = scmp.lt.s32.totalorder %s402, 16
      %s404 = scalar_select %p403, %s402, 16
      %s405 = smul.u32 64, %s404
      %s406 = smul.u32 %s405, 2
      %s407 = smul.u32 %s23, 16
      %s408 = sadd.s32 %s407, 16
      %p409 = scmp.lt.s32.totalorder %s22, 1
      %s410 = scalar_select %p409, %s22, 1
      %p411 = scmp.lt.s32.totalorder %s408, 17
      %s412 = scalar_select %p411, %s408, 17
      %s413 = smul.addr %s412, 2
      %s414 = smul.addr %s410, 36
      %s415 = sadd.s32 %s413, %s414
      %s416 = smul.addr %s415, 4
      %s417 = scalar_lea.vmem %s1, %s416
      %s418 = smul.u32 %s23, 16
      %s419 = sadd.s32 %s418, 16
      %s420 = smul.u32 %s23, 16
      %s421 = sadd.s32 %s420, 17
      %p422 = scmp.lt.s32.totalorder %s22, 1
      %s423 = scalar_select %p422, %s22, 1
      %p424 = scmp.lt.s32.totalorder %s421, 17
      %s425 = scalar_select %p424, %s421, 17
      %s426 = smul.addr %s425, 2
      %s427 = smul.addr %s423, 36
      %s428 = sadd.s32 %s426, %s427
      %s429 = smul.addr %s428, 4
      %s430 = scalar_lea.vmem %s2, %s429
      %s431 = smul.u32 %s23, 16
      %s432 = sadd.s32 %s431, 17
      %s433 = smul.u32 16, %s23
      %p434 = scmp.lt.s32.totalorder %s22, 1
      %s435 = scalar_select %p434, %s22, 1
      %p436 = scmp.lt.s32.totalorder %s433, 15
      %s437 = scalar_select %p436, %s433, 15
      %s438 = smul.addr %s437, 2
      %s439 = smul.addr %s435, 32
      %s440 = sadd.s32 %s438, %s439
      %s441 = smul.addr %s440, 8
      %s442 = scalar_lea.vmem %s7, %s441
      %s443 = smul.u32 16, %s23
      %v445 = vld [vmem:[%s400] sm:$0xf]
      %v446 = vld [vmem:[%s400 + $0x4] sm:$0xf]
      %v447 = vld [vmem:[%s400 + $0x8] sm:$0xf]
      %v448 = vld [vmem:[%s400 + $0xc] sm:$0xf]
      %v449 = vld [vmem:[%s400 + $0x10] sm:$0xf]
      %v450 = vld [vmem:[%s400 + $0x14] sm:$0xf]
      %v451 = vld [vmem:[%s400 + $0x18] sm:$0xf]
      %v452 = vld [vmem:[%s400 + $0x1c] sm:$0xf]
      %v453 = vld [vmem:[%s400 + $0x20] sm:$0xf]
      %v454 = vld [vmem:[%s400 + $0x24] sm:$0xf]
      %v455 = vld [vmem:[%s400 + $0x28] sm:$0xf]
      %v456 = vld [vmem:[%s400 + $0x2c] sm:$0xf]
      %v457 = vld [vmem:[%s400 + $0x30] sm:$0xf]
      %v458 = vld [vmem:[%s400 + $0x34] sm:$0xf]
      %v459 = vld [vmem:[%s400 + $0x38] sm:$0xf]
      %v460 = vld [vmem:[%s400 + $0x3c] sm:$0xf]
      %v461 = vld [vmem:[%s400 + $0x40] sm:$0xf]
      %v462 = vld [vmem:[%s400 + $0x44] sm:$0xf]
      %v463 = vld [vmem:[%s400 + $0x48] sm:$0xf]
      %v464 = vld [vmem:[%s400 + $0x4c] sm:$0xf]
      %v465 = vld [vmem:[%s400 + $0x50] sm:$0xf]
      %v466 = vld [vmem:[%s400 + $0x54] sm:$0xf]
      %v467 = vld [vmem:[%s400 + $0x58] sm:$0xf]
      %v468 = vld [vmem:[%s400 + $0x5c] sm:$0xf]
      %v469 = vld [vmem:[%s400 + $0x60] sm:$0xf]
      %v470 = vld [vmem:[%s400 + $0x64] sm:$0xf]
      %v471 = vld [vmem:[%s400 + $0x68] sm:$0xf]
      %v472 = vld [vmem:[%s400 + $0x6c] sm:$0xf]
      %v473 = vld [vmem:[%s400 + $0x70] sm:$0xf]
      %v474 = vld [vmem:[%s400 + $0x74] sm:$0xf]
      %v475 = vld [vmem:[%s400 + $0x78] sm:$0xf]
      %v476 = vld [vmem:[%s400 + $0x7c] sm:$0xf]
      %v477 = vld [vmem:[%s417] sm:$0xf]
      %v478 = vld [vmem:[%s417 + $0x4] sm:$0xf]
      %v479 = vld [vmem:[%s430] sm:$0xf]
      %v480 = vld [vmem:[%s430 + $0x4] sm:$0xf]
      %v481 = vld [vmem:[%s3] sm:$0xf]
      %v482 = vld [vmem:[%s3 + $0x4] sm:$0x3]
      %s483 = scalar_lea.vmem %s3, 8
      %v484 = vld [vmem:[%s483] sm:$0xf]
      %v485 = vld [vmem:[%s483 + $0x4] sm:$0x3]
      %v518 = vunpack.c.l.b16 %v447
      %v519 = vunpack.c.l.b16 %v448
      %v520 = vunpack.c.l.b16 %v449
      %v521 = vunpack.c.l.b16 %v450
      %v522 = vunpack.c.l.b16 %v451
      %v523 = vunpack.c.l.b16 %v452
      %v524 = vunpack.c.l.b16 %v453
      %v525 = vunpack.c.l.b16 %v454
      %v526 = vunpack.c.l.b16 %v455
      %v527 = vunpack.c.l.b16 %v456
      %v528 = vunpack.c.l.b16 %v457
      %v529 = vunpack.c.l.b16 %v458
      %v530 = vunpack.c.l.b16 %v459
      %v531 = vunpack.c.l.b16 %v460
      %v532 = vunpack.c.l.b16 %v461
      %v533 = vunpack.c.l.b16 %v462
      %v534 = vunpack.c.l.b16 %v463
      %v535 = vunpack.c.l.b16 %v464
      %v536 = vunpack.c.l.b16 %v465
      %v537 = vunpack.c.l.b16 %v466
      %v538 = vunpack.c.l.b16 %v467
      %v539 = vunpack.c.l.b16 %v468
      %v540 = vunpack.c.l.b16 %v469
      %v541 = vunpack.c.l.b16 %v470
      %v542 = vunpack.c.l.b16 %v471
      %v543 = vunpack.c.l.b16 %v472
      %v544 = vunpack.c.l.b16 %v473
      %v545 = vunpack.c.l.b16 %v474
      %v546 = vunpack.c.l.b16 %v475
      %v547 = vunpack.c.l.b16 %v476
      %v548 = vunpack.c.l.b16 %v477
      %v549 = vunpack.c.l.b16 %v478
      %v550 = vpack.c.b16 %v519, %v518
      %v551 = vpack.c.b16 %v521, %v520
      %v552 = vpack.c.b16 %v523, %v522
      %v553 = vpack.c.b16 %v525, %v524
      %v554 = vpack.c.b16 %v527, %v526
      %v555 = vpack.c.b16 %v529, %v528
      %v556 = vpack.c.b16 %v531, %v530
      %v557 = vpack.c.b16 %v533, %v532
      %v558 = vpack.c.b16 %v535, %v534
      %v559 = vpack.c.b16 %v537, %v536
      %v560 = vpack.c.b16 %v539, %v538
      %v561 = vpack.c.b16 %v541, %v540
      %v562 = vpack.c.b16 %v543, %v542
      %v563 = vpack.c.b16 %v545, %v544
      %v564 = vpack.c.b16 %v547, %v546
      %v565 = vpack.c.b16 %v549, %v548
      %v568 = vunpack.c.l.b16 %v484
      %v569 = vunpack.c.l.b16 %v485
      %v570 = vpack.c.b16 %v569, %v568
      %vm571 = vcmask 97280
      %v573 = vsel %vm571, %v550, 0
      %v576 = vsel %vm571, %v551, 0
      %v579 = vsel %vm571, %v552, 0
      %v582 = vsel %vm571, %v553, 0
      %v585 = vsel %vm571, %v554, 0
      %v588 = vsel %vm571, %v555, 0
      %v591 = vsel %vm571, %v556, 0
      %v594 = vsel %vm571, %v557, 0
      %v597 = vsel %vm571, %v558, 0
      %v600 = vsel %vm571, %v559, 0
      %v603 = vsel %vm571, %v560, 0
      %v606 = vsel %vm571, %v561, 0
      %v609 = vsel %vm571, %v562, 0
      %v612 = vsel %vm571, %v563, 0
      %v615 = vsel %vm571, %v564, 0
      %v618 = vsel %vm571, %v565, 0
      %vm620 = vcmask 1045504
      %v622 = vsel %vm620, %v570, 0
      %624 = vmatprep.subr.bf16.mxu0 0
      %625 = vmatpush1.bf16.msra.mxu0 %v622
      %626 = vmatprep.subr.bf16.mxu0 0
      %627 = vmatpush1.bf16.msra.mxu0 0
      %628 = vmatprep.subr.bf16.mxu0 0
      %629 = vmatpush1.bf16.msra.mxu0 0
      %630 = vmatprep.subr.bf16.mxu0 0
      %631 = vmatpush1.bf16.msra.mxu0 0
      %632 = vmatprep.subr.bf16.mxu0 0
      %633 = vmatpush1.bf16.msra.mxu0 0
      %634 = vmatprep.subr.bf16.mxu0 0
      %635 = vmatpush1.bf16.msra.mxu0 0
      %636 = vmatprep.subr.bf16.mxu0 0
      %637 = vmatpush1.bf16.msra.mxu0 0
      %638 = vmatprep.subr.bf16.mxu0 0
      %639 = vmatpush1.bf16.msra.mxu0 0
      %640 = vmatprep.subr.bf16.mxu0 0
      %641 = vmatpush1.bf16.msra.mxu0 0
      %642 = vmatprep.subr.bf16.mxu0 0
      %643 = vmatpush1.bf16.msra.mxu0 0
      %644 = vmatprep.subr.bf16.mxu0 0
      %645 = vmatpush1.bf16.msra.mxu0 0
      %646 = vmatprep.subr.bf16.mxu0 0
      %647 = vmatpush1.bf16.msra.mxu0 0
      %648 = vmatprep.subr.bf16.mxu0 0
      %649 = vmatpush1.bf16.msra.mxu0 0
      %650 = vmatprep.subr.bf16.mxu0 0
      %651 = vmatpush1.bf16.msra.mxu0 0
      %652 = vmatprep.subr.bf16.mxu0 0
      %653 = vmatpush1.bf16.msra.mxu0 0
      %654 = vmatprep.subr.bf16.mxu0 0
      %655 = vmatpush1.bf16.msra.mxu0 0
      %656 = vmatprep.mubr.bf16.mxu0 0
      %657 = vmatmul.mubr.bf16.gmra.mrb[0].mxu0 %v573
      %v658 = vpop.f32.mrb[0].mxu0
      %v659 = vadd.f32 0.0, %v658
      %v660 = vpop.f32.mrb[0].mxu0
      %v661 = vpop.f32.mrb[0].mxu0
      %v662 = vadd.f32 0.0, %v661
      %v663 = vpop.f32.mrb[0].mxu0
      %664 = vmatprep.mubr.bf16.mxu0 0
      %665 = vmatmul.mubr.bf16.gmra.mrb[0].mxu0 %v576
      %v666 = vpop.f32.mrb[0].mxu0
      %v667 = vadd.f32 0.0, %v666
      %v668 = vpop.f32.mrb[0].mxu0
      %v669 = vpop.f32.mrb[0].mxu0
      %v670 = vadd.f32 0.0, %v669
      %v671 = vpop.f32.mrb[0].mxu0
      %672 = vmatprep.mubr.bf16.mxu0 0
      %673 = vmatmul.mubr.bf16.gmra.mrb[0].mxu0 %v579
      %v674 = vpop.f32.mrb[0].mxu0
      %v675 = vadd.f32 0.0, %v674
      %v676 = vpop.f32.mrb[0].mxu0
      %v677 = vpop.f32.mrb[0].mxu0
      %v678 = vadd.f32 0.0, %v677
      %v679 = vpop.f32.mrb[0].mxu0
      %680 = vmatprep.mubr.bf16.mxu0 0
      %681 = vmatmul.mubr.bf16.gmra.mrb[0].mxu0 %v582
      %v682 = vpop.f32.mrb[0].mxu0
      %v683 = vadd.f32 0.0, %v682
      %v684 = vpop.f32.mrb[0].mxu0
      %v685 = vpop.f32.mrb[0].mxu0
      %v686 = vadd.f32 0.0, %v685
      %v687 = vpop.f32.mrb[0].mxu0
      %688 = vmatprep.mubr.bf16.mxu0 0
      %689 = vmatmul.mubr.bf16.gmra.mrb[0].mxu0 %v585
      %v690 = vpop.f32.mrb[0].mxu0
      %v691 = vadd.f32 0.0, %v690
      %v692 = vpop.f32.mrb[0].mxu0
      %v693 = vpop.f32.mrb[0].mxu0
      %v694 = vadd.f32 0.0, %v693
      %v695 = vpop.f32.mrb[0].mxu0
      %696 = vmatprep.mubr.bf16.mxu0 0
      %697 = vmatmul.mubr.bf16.gmra.mrb[0].mxu0 %v588
      %v698 = vpop.f32.mrb[0].mxu0
      %v699 = vadd.f32 0.0, %v698
      %v700 = vpop.f32.mrb[0].mxu0
      %v701 = vpop.f32.mrb[0].mxu0
      %v702 = vadd.f32 0.0, %v701
      %v703 = vpop.f32.mrb[0].mxu0
      %704 = vmatprep.mubr.bf16.mxu0 0
      %705 = vmatmul.mubr.bf16.gmra.mrb[0].mxu0 %v591
      %v706 = vpop.f32.mrb[0].mxu0
      %v707 = vadd.f32 0.0, %v706
      %v708 = vpop.f32.mrb[0].mxu0
      %v709 = vpop.f32.mrb[0].mxu0
      %v710 = vadd.f32 0.0, %v709
      %v711 = vpop.f32.mrb[0].mxu0
      %712 = vmatprep.mubr.bf16.mxu0 0
      %713 = vmatmul.mubr.bf16.gmra.mrb[0].mxu0 %v594
      %v714 = vpop.f32.mrb[0].mxu0
      %v715 = vadd.f32 0.0, %v714
      %v716 = vpop.f32.mrb[0].mxu0
      %v717 = vpop.f32.mrb[0].mxu0
      %v718 = vadd.f32 0.0, %v717
      %v719 = vpop.f32.mrb[0].mxu0
      %720 = vmatprep.mubr.bf16.mxu0 0
      %721 = vmatmul.mubr.bf16.gmra.mrb[0].mxu0 %v597
      %v722 = vpop.f32.mrb[0].mxu0
      %v723 = vadd.f32 0.0, %v722
      %v724 = vpop.f32.mrb[0].mxu0
      %v725 = vpop.f32.mrb[0].mxu0
      %v726 = vadd.f32 0.0, %v725
      %v727 = vpop.f32.mrb[0].mxu0
      %728 = vmatprep.mubr.bf16.mxu0 0
      %729 = vmatmul.mubr.bf16.gmra.mrb[0].mxu0 %v600
      %v730 = vpop.f32.mrb[0].mxu0
      %v731 = vadd.f32 0.0, %v730
      %v732 = vpop.f32.mrb[0].mxu0
      %v733 = vpop.f32.mrb[0].mxu0
      %v734 = vadd.f32 0.0, %v733
      %v735 = vpop.f32.mrb[0].mxu0
      %736 = vmatprep.mubr.bf16.mxu0 0
      %737 = vmatmul.mubr.bf16.gmra.mrb[0].mxu0 %v603
      %v738 = vpop.f32.mrb[0].mxu0
      %v739 = vadd.f32 0.0, %v738
      %v740 = vpop.f32.mrb[0].mxu0
      %v741 = vpop.f32.mrb[0].mxu0
      %v742 = vadd.f32 0.0, %v741
      %v743 = vpop.f32.mrb[0].mxu0
      %744 = vmatprep.mubr.bf16.mxu0 0
      %745 = vmatmul.mubr.bf16.gmra.mrb[0].mxu0 %v606
      %v746 = vpop.f32.mrb[0].mxu0
      %v747 = vadd.f32 0.0, %v746
      %v748 = vpop.f32.mrb[0].mxu0
      %v749 = vpop.f32.mrb[0].mxu0
      %v750 = vadd.f32 0.0, %v749
      %v751 = vpop.f32.mrb[0].mxu0
      %752 = vmatprep.mubr.bf16.mxu0 0
      %753 = vmatmul.mubr.bf16.gmra.mrb[0].mxu0 %v609
      %v754 = vpop.f32.mrb[0].mxu0
      %v755 = vadd.f32 0.0, %v754
      %v756 = vpop.f32.mrb[0].mxu0
      %v757 = vpop.f32.mrb[0].mxu0
      %v758 = vadd.f32 0.0, %v757
      %v759 = vpop.f32.mrb[0].mxu0
      %760 = vmatprep.mubr.bf16.mxu0 0
      %761 = vmatmul.mubr.bf16.gmra.mrb[0].mxu0 %v612
      %v762 = vpop.f32.mrb[0].mxu0
      %v763 = vadd.f32 0.0, %v762
      %v764 = vpop.f32.mrb[0].mxu0
      %v765 = vpop.f32.mrb[0].mxu0
      %v766 = vadd.f32 0.0, %v765
      %v767 = vpop.f32.mrb[0].mxu0
      %768 = vmatprep.mubr.bf16.mxu0 0
      %769 = vmatmul.mubr.bf16.gmra.mrb[0].mxu0 %v615
      %v770 = vpop.f32.mrb[0].mxu0
      %v771 = vadd.f32 0.0, %v770
      %v772 = vpop.f32.mrb[0].mxu0
      %v773 = vpop.f32.mrb[0].mxu0
      %v774 = vadd.f32 0.0, %v773
      %v775 = vpop.f32.mrb[0].mxu0
      %776 = vmatprep.mubr.bf16.mxu0 0
      %777 = vmatmul.mubr.bf16.gmra.mrb[0].mxu0 %v618
      %v778 = vpop.f32.mrb[0].mxu0
      %v779 = vadd.f32 0.0, %v778
      %v780 = vpop.f32.mrb[0].mxu0
      %v781 = vpop.f32.mrb[0].mxu0
      %v782 = vadd.f32 0.0, %v781
      %v783 = vpop.f32.mrb[0].mxu0
      %784 = vdwg.mxu0
      %v787 = vunpack.c.l.b16 %v445
      %v788 = vunpack.c.l.b16 %v446
      %v789 = vpack.c.b16 %v788, %v787
      %v792 = vunpack.c.l.b16 %v481
      %v793 = vunpack.c.l.b16 %v482
      %v794 = vpack.c.b16 %v793, %v792
      %v796 = vsel %vm571, %v789, 0
      %v799 = vsel %vm620, %v794, 0
      %801 = vmatprep.subr.bf16.mxu0 0
      %802 = vmatpush1.bf16.msra.mxu0 %v799
      %803 = vmatprep.subr.bf16.mxu0 0
      %804 = vmatpush1.bf16.msra.mxu0 0
      %805 = vmatprep.subr.bf16.mxu0 0
      %806 = vmatpush1.bf16.msra.mxu0 0
      %807 = vmatprep.subr.bf16.mxu0 0
      %808 = vmatpush1.bf16.msra.mxu0 0
      %809 = vmatprep.subr.bf16.mxu0 0
      %810 = vmatpush1.bf16.msra.mxu0 0
      %811 = vmatprep.subr.bf16.mxu0 0
      %812 = vmatpush1.bf16.msra.mxu0 0
      %813 = vmatprep.subr.bf16.mxu0 0
      %814 = vmatpush1.bf16.msra.mxu0 0
      %815 = vmatprep.subr.bf16.mxu0 0
      %816 = vmatpush1.bf16.msra.mxu0 0
      %817 = vmatprep.subr.bf16.mxu0 0
      %818 = vmatpush1.bf16.msra.mxu0 0
      %819 = vmatprep.subr.bf16.mxu0 0
      %820 = vmatpush1.bf16.msra.mxu0 0
      %821 = vmatprep.subr.bf16.mxu0 0
      %822 = vmatpush1.bf16.msra.mxu0 0
      %823 = vmatprep.subr.bf16.mxu0 0
      %824 = vmatpush1.bf16.msra.mxu0 0
      %825 = vmatprep.subr.bf16.mxu0 0
      %826 = vmatpush1.bf16.msra.mxu0 0
      %827 = vmatprep.subr.bf16.mxu0 0
      %828 = vmatpush1.bf16.msra.mxu0 0
      %829 = vmatprep.subr.bf16.mxu0 0
      %830 = vmatpush1.bf16.msra.mxu0 0
      %831 = vmatprep.subr.bf16.mxu0 0
      %832 = vmatpush1.bf16.msra.mxu0 0
      %833 = vmatprep.mubr.bf16.mxu0 0
      %834 = vmatmul.mubr.bf16.gmra.mrb[0].mxu0 %v796
      %v835 = vpop.f32.mrb[0].mxu0
      %v836 = vadd.f32 %v659, %v835
      %v837 = vpop.f32.mrb[0].mxu0
      %v838 = vpop.f32.mrb[0].mxu0
      %v839 = vadd.f32 %v662, %v838
      %v840 = vpop.f32.mrb[0].mxu0
      %841 = vmatprep.mubr.bf16.mxu0 0
      %842 = vmatmul.mubr.bf16.gmra.mrb[0].mxu0 %v573
      %v843 = vpop.f32.mrb[0].mxu0
      %v844 = vadd.f32 %v667, %v843
      %v845 = vpop.f32.mrb[0].mxu0
      %v846 = vpop.f32.mrb[0].mxu0
      %v847 = vadd.f32 %v670, %v846
      %v848 = vpop.f32.mrb[0].mxu0
      %849 = vmatprep.mubr.bf16.mxu0 0
      %850 = vmatmul.mubr.bf16.gmra.mrb[0].mxu0 %v576
      %v851 = vpop.f32.mrb[0].mxu0
      %v852 = vadd.f32 %v675, %v851
      %v853 = vpop.f32.mrb[0].mxu0
      %v854 = vpop.f32.mrb[0].mxu0
      %v855 = vadd.f32 %v678, %v854
      %v856 = vpop.f32.mrb[0].mxu0
      %857 = vmatprep.mubr.bf16.mxu0 0
      %858 = vmatmul.mubr.bf16.gmra.mrb[0].mxu0 %v579
      %v859 = vpop.f32.mrb[0].mxu0
      %v860 = vadd.f32 %v683, %v859
      %v861 = vpop.f32.mrb[0].mxu0
      %v862 = vpop.f32.mrb[0].mxu0
      %v863 = vadd.f32 %v686, %v862
      %v864 = vpop.f32.mrb[0].mxu0
      %865 = vmatprep.mubr.bf16.mxu0 0
      %866 = vmatmul.mubr.bf16.gmra.mrb[0].mxu0 %v582
      %v867 = vpop.f32.mrb[0].mxu0
      %v868 = vadd.f32 %v691, %v867
      %v869 = vpop.f32.mrb[0].mxu0
      %v870 = vpop.f32.mrb[0].mxu0
      %v871 = vadd.f32 %v694, %v870
      %v872 = vpop.f32.mrb[0].mxu0
      %873 = vmatprep.mubr.bf16.mxu0 0
      %874 = vmatmul.mubr.bf16.gmra.mrb[0].mxu0 %v585
      %v875 = vpop.f32.mrb[0].mxu0
      %v876 = vadd.f32 %v699, %v875
      %v877 = vpop.f32.mrb[0].mxu0
      %v878 = vpop.f32.mrb[0].mxu0
      %v879 = vadd.f32 %v702, %v878
      %v880 = vpop.f32.mrb[0].mxu0
      %881 = vmatprep.mubr.bf16.mxu0 0
      %882 = vmatmul.mubr.bf16.gmra.mrb[0].mxu0 %v588
      %v883 = vpop.f32.mrb[0].mxu0
      %v884 = vadd.f32 %v707, %v883
      %v885 = vpop.f32.mrb[0].mxu0
      %v886 = vpop.f32.mrb[0].mxu0
      %v887 = vadd.f32 %v710, %v886
      %v888 = vpop.f32.mrb[0].mxu0
      %889 = vmatprep.mubr.bf16.mxu0 0
      %890 = vmatmul.mubr.bf16.gmra.mrb[0].mxu0 %v591
      %v891 = vpop.f32.mrb[0].mxu0
      %v892 = vadd.f32 %v715, %v891
      %v893 = vpop.f32.mrb[0].mxu0
      %v894 = vpop.f32.mrb[0].mxu0
      %v895 = vadd.f32 %v718, %v894
      %v896 = vpop.f32.mrb[0].mxu0
      %897 = vmatprep.mubr.bf16.mxu0 0
      %898 = vmatmul.mubr.bf16.gmra.mrb[0].mxu0 %v594
      %v899 = vpop.f32.mrb[0].mxu0
      %v900 = vadd.f32 %v723, %v899
      %v901 = vpop.f32.mrb[0].mxu0
      %v902 = vpop.f32.mrb[0].mxu0
      %v903 = vadd.f32 %v726, %v902
      %v904 = vpop.f32.mrb[0].mxu0
      %905 = vmatprep.mubr.bf16.mxu0 0
      %906 = vmatmul.mubr.bf16.gmra.mrb[0].mxu0 %v597
      %v907 = vpop.f32.mrb[0].mxu0
      %v908 = vadd.f32 %v731, %v907
      %v909 = vpop.f32.mrb[0].mxu0
      %v910 = vpop.f32.mrb[0].mxu0
      %v911 = vadd.f32 %v734, %v910
      %v912 = vpop.f32.mrb[0].mxu0
      %913 = vmatprep.mubr.bf16.mxu0 0
      %914 = vmatmul.mubr.bf16.gmra.mrb[0].mxu0 %v600
      %v915 = vpop.f32.mrb[0].mxu0
      %v916 = vadd.f32 %v739, %v915
      %v917 = vpop.f32.mrb[0].mxu0
      %v918 = vpop.f32.mrb[0].mxu0
      %v919 = vadd.f32 %v742, %v918
      %v920 = vpop.f32.mrb[0].mxu0
      %921 = vmatprep.mubr.bf16.mxu0 0
      %922 = vmatmul.mubr.bf16.gmra.mrb[0].mxu0 %v603
      %v923 = vpop.f32.mrb[0].mxu0
      %v924 = vadd.f32 %v747, %v923
      %v925 = vpop.f32.mrb[0].mxu0
      %v926 = vpop.f32.mrb[0].mxu0
      %v927 = vadd.f32 %v750, %v926
      %v928 = vpop.f32.mrb[0].mxu0
      %929 = vmatprep.mubr.bf16.mxu0 0
      %930 = vmatmul.mubr.bf16.gmra.mrb[0].mxu0 %v606
      %v931 = vpop.f32.mrb[0].mxu0
      %v932 = vadd.f32 %v755, %v931
      %v933 = vpop.f32.mrb[0].mxu0
      %v934 = vpop.f32.mrb[0].mxu0
      %v935 = vadd.f32 %v758, %v934
      %v936 = vpop.f32.mrb[0].mxu0
      %937 = vmatprep.mubr.bf16.mxu0 0
      %938 = vmatmul.mubr.bf16.gmra.mrb[0].mxu0 %v609
      %v939 = vpop.f32.mrb[0].mxu0
      %v940 = vadd.f32 %v763, %v939
      %v941 = vpop.f32.mrb[0].mxu0
      %v942 = vpop.f32.mrb[0].mxu0
      %v943 = vadd.f32 %v766, %v942
      %v944 = vpop.f32.mrb[0].mxu0
      %945 = vmatprep.mubr.bf16.mxu0 0
      %946 = vmatmul.mubr.bf16.gmra.mrb[0].mxu0 %v612
      %v947 = vpop.f32.mrb[0].mxu0
      %v948 = vadd.f32 %v771, %v947
      %v949 = vpop.f32.mrb[0].mxu0
      %v950 = vpop.f32.mrb[0].mxu0
      %v951 = vadd.f32 %v774, %v950
      %v952 = vpop.f32.mrb[0].mxu0
      %953 = vmatprep.mubr.bf16.mxu0 0
      %954 = vmatmul.mubr.bf16.gmra.mrb[0].mxu0 %v615
      %v955 = vpop.f32.mrb[0].mxu0
      %v956 = vadd.f32 %v779, %v955
      %v957 = vpop.f32.mrb[0].mxu0
      %v958 = vpop.f32.mrb[0].mxu0
      %v959 = vadd.f32 %v782, %v958
      %v960 = vpop.f32.mrb[0].mxu0
      %961 = vdwg.mxu0
      %s962 = scalar_lea.vmem %s3, 16
      %v963 = vld [vmem:[%s962] sm:$0xf]
      %v964 = vld [vmem:[%s962 + $0x4] sm:$0x3]
      %v967 = vunpack.c.l.b16 %v479
      %v968 = vunpack.c.l.b16 %v480
      %v969 = vpack.c.b16 %v968, %v967
      %v972 = vunpack.c.l.b16 %v963
      %v973 = vunpack.c.l.b16 %v964
      %v974 = vpack.c.b16 %v973, %v972
      %v976 = vsel %vm571, %v969, 0
      %v979 = vsel %vm620, %v974, 0
      %981 = vmatprep.subr.bf16.mxu0 0
      %982 = vmatpush1.bf16.msra.mxu0 %v979
      %983 = vmatprep.subr.bf16.mxu0 0
      %984 = vmatpush1.bf16.msra.mxu0 0
      %985 = vmatprep.subr.bf16.mxu0 0
      %986 = vmatpush1.bf16.msra.mxu0 0
      %987 = vmatprep.subr.bf16.mxu0 0
      %988 = vmatpush1.bf16.msra.mxu0 0
      %989 = vmatprep.subr.bf16.mxu0 0
      %990 = vmatpush1.bf16.msra.mxu0 0
      %991 = vmatprep.subr.bf16.mxu0 0
      %992 = vmatpush1.bf16.msra.mxu0 0
      %993 = vmatprep.subr.bf16.mxu0 0
      %994 = vmatpush1.bf16.msra.mxu0 0
      %995 = vmatprep.subr.bf16.mxu0 0
      %996 = vmatpush1.bf16.msra.mxu0 0
      %997 = vmatprep.subr.bf16.mxu0 0
      %998 = vmatpush1.bf16.msra.mxu0 0
      %999 = vmatprep.subr.bf16.mxu0 0
      %1000 = vmatpush1.bf16.msra.mxu0 0
      %1001 = vmatprep.subr.bf16.mxu0 0
      %1002 = vmatpush1.bf16.msra.mxu0 0
      %1003 = vmatprep.subr.bf16.mxu0 0
      %1004 = vmatpush1.bf16.msra.mxu0 0
      %1005 = vmatprep.subr.bf16.mxu0 0
      %1006 = vmatpush1.bf16.msra.mxu0 0
      %1007 = vmatprep.subr.bf16.mxu0 0
      %1008 = vmatpush1.bf16.msra.mxu0 0
      %1009 = vmatprep.subr.bf16.mxu0 0
      %1010 = vmatpush1.bf16.msra.mxu0 0
      %1011 = vmatprep.subr.bf16.mxu0 0
      %1012 = vmatpush1.bf16.msra.mxu0 0
      %1013 = vmatprep.mubr.bf16.mxu0 0
      %1014 = vmatmul.mubr.bf16.gmra.mrb[0].mxu0 %v576
      %v1015 = vpop.f32.mrb[0].mxu0
      %v1016 = vadd.f32 0.0, %v1015
      %v1017 = vpop.f32.mrb[0].mxu0
      %v1018 = vpop.f32.mrb[0].mxu0
      %v1019 = vadd.f32 0.0, %v1018
      %v1020 = vpop.f32.mrb[0].mxu0
      %1021 = vmatprep.mubr.bf16.mxu0 0
      %1022 = vmatmul.mubr.bf16.gmra.mrb[0].mxu0 %v579
      %v1023 = vpop.f32.mrb[0].mxu0
      %v1024 = vadd.f32 0.0, %v1023
      %v1025 = vpop.f32.mrb[0].mxu0
      %v1026 = vpop.f32.mrb[0].mxu0
      %v1027 = vadd.f32 0.0, %v1026
      %v1028 = vpop.f32.mrb[0].mxu0
      %1029 = vmatprep.mubr.bf16.mxu0 0
      %1030 = vmatmul.mubr.bf16.gmra.mrb[0].mxu0 %v582
      %v1031 = vpop.f32.mrb[0].mxu0
      %v1032 = vadd.f32 0.0, %v1031
      %v1033 = vpop.f32.mrb[0].mxu0
      %v1034 = vpop.f32.mrb[0].mxu0
      %v1035 = vadd.f32 0.0, %v1034
      %v1036 = vpop.f32.mrb[0].mxu0
      %1037 = vmatprep.mubr.bf16.mxu0 0
      %1038 = vmatmul.mubr.bf16.gmra.mrb[0].mxu0 %v585
      %v1039 = vpop.f32.mrb[0].mxu0
      %v1040 = vadd.f32 0.0, %v1039
      %v1041 = vpop.f32.mrb[0].mxu0
      %v1042 = vpop.f32.mrb[0].mxu0
      %v1043 = vadd.f32 0.0, %v1042
      %v1044 = vpop.f32.mrb[0].mxu0
      %1045 = vmatprep.mubr.bf16.mxu0 0
      %1046 = vmatmul.mubr.bf16.gmra.mrb[0].mxu0 %v588
      %v1047 = vpop.f32.mrb[0].mxu0
      %v1048 = vadd.f32 0.0, %v1047
      %v1049 = vpop.f32.mrb[0].mxu0
      %v1050 = vpop.f32.mrb[0].mxu0
      %v1051 = vadd.f32 0.0, %v1050
      %v1052 = vpop.f32.mrb[0].mxu0
      %1053 = vmatprep.mubr.bf16.mxu0 0
      %1054 = vmatmul.mubr.bf16.gmra.mrb[0].mxu0 %v591
      %v1055 = vpop.f32.mrb[0].mxu0
      %v1056 = vadd.f32 0.0, %v1055
      %v1057 = vpop.f32.mrb[0].mxu0
      %v1058 = vpop.f32.mrb[0].mxu0
      %v1059 = vadd.f32 0.0, %v1058
      %v1060 = vpop.f32.mrb[0].mxu0
      %1061 = vmatprep.mubr.bf16.mxu0 0
      %1062 = vmatmul.mubr.bf16.gmra.mrb[0].mxu0 %v594
      %v1063 = vpop.f32.mrb[0].mxu0
      %v1064 = vadd.f32 0.0, %v1063
      %v1065 = vpop.f32.mrb[0].mxu0
      %v1066 = vpop.f32.mrb[0].mxu0
      %v1067 = vadd.f32 0.0, %v1066
      %v1068 = vpop.f32.mrb[0].mxu0
      %1069 = vmatprep.mubr.bf16.mxu0 0
      %1070 = vmatmul.mubr.bf16.gmra.mrb[0].mxu0 %v597
      %v1071 = vpop.f32.mrb[0].mxu0
      %v1072 = vadd.f32 0.0, %v1071
      %v1073 = vpop.f32.mrb[0].mxu0
      %v1074 = vpop.f32.mrb[0].mxu0
      %v1075 = vadd.f32 0.0, %v1074
      %v1076 = vpop.f32.mrb[0].mxu0
      %1077 = vmatprep.mubr.bf16.mxu0 0
      %1078 = vmatmul.mubr.bf16.gmra.mrb[0].mxu0 %v600
      %v1079 = vpop.f32.mrb[0].mxu0
      %v1080 = vadd.f32 0.0, %v1079
      %v1081 = vpop.f32.mrb[0].mxu0
      %v1082 = vpop.f32.mrb[0].mxu0
      %v1083 = vadd.f32 0.0, %v1082
      %v1084 = vpop.f32.mrb[0].mxu0
      %1085 = vmatprep.mubr.bf16.mxu0 0
      %1086 = vmatmul.mubr.bf16.gmra.mrb[0].mxu0 %v603
      %v1087 = vpop.f32.mrb[0].mxu0
      %v1088 = vadd.f32 0.0, %v1087
      %v1089 = vpop.f32.mrb[0].mxu0
      %v1090 = vpop.f32.mrb[0].mxu0
      %v1091 = vadd.f32 0.0, %v1090
      %v1092 = vpop.f32.mrb[0].mxu0
      %1093 = vmatprep.mubr.bf16.mxu0 0
      %1094 = vmatmul.mubr.bf16.gmra.mrb[0].mxu0 %v606
      %v1095 = vpop.f32.mrb[0].mxu0
      %v1096 = vadd.f32 0.0, %v1095
      %v1097 = vpop.f32.mrb[0].mxu0
      %v1098 = vpop.f32.mrb[0].mxu0
      %v1099 = vadd.f32 0.0, %v1098
      %v1100 = vpop.f32.mrb[0].mxu0
      %1101 = vmatprep.mubr.bf16.mxu0 0
      %1102 = vmatmul.mubr.bf16.gmra.mrb[0].mxu0 %v609
      %v1103 = vpop.f32.mrb[0].mxu0
      %v1104 = vadd.f32 0.0, %v1103
      %v1105 = vpop.f32.mrb[0].mxu0
      %v1106 = vpop.f32.mrb[0].mxu0
      %v1107 = vadd.f32 0.0, %v1106
      %v1108 = vpop.f32.mrb[0].mxu0
      %1109 = vmatprep.mubr.bf16.mxu0 0
      %1110 = vmatmul.mubr.bf16.gmra.mrb[0].mxu0 %v612
      %v1111 = vpop.f32.mrb[0].mxu0
      %v1112 = vadd.f32 0.0, %v1111
      %v1113 = vpop.f32.mrb[0].mxu0
      %v1114 = vpop.f32.mrb[0].mxu0
      %v1115 = vadd.f32 0.0, %v1114
      %v1116 = vpop.f32.mrb[0].mxu0
      %1117 = vmatprep.mubr.bf16.mxu0 0
      %1118 = vmatmul.mubr.bf16.gmra.mrb[0].mxu0 %v615
      %v1119 = vpop.f32.mrb[0].mxu0
      %v1120 = vadd.f32 0.0, %v1119
      %v1121 = vpop.f32.mrb[0].mxu0
      %v1122 = vpop.f32.mrb[0].mxu0
      %v1123 = vadd.f32 0.0, %v1122
      %v1124 = vpop.f32.mrb[0].mxu0
      %1125 = vmatprep.mubr.bf16.mxu0 0
      %1126 = vmatmul.mubr.bf16.gmra.mrb[0].mxu0 %v618
      %v1127 = vpop.f32.mrb[0].mxu0
      %v1128 = vadd.f32 0.0, %v1127
      %v1129 = vpop.f32.mrb[0].mxu0
      %v1130 = vpop.f32.mrb[0].mxu0
      %v1131 = vadd.f32 0.0, %v1130
      %v1132 = vpop.f32.mrb[0].mxu0
      %1133 = vmatprep.mubr.bf16.mxu0 0
      %1134 = vmatmul.mubr.bf16.gmra.mrb[0].mxu0 %v976
      %v1135 = vpop.f32.mrb[0].mxu0
      %v1136 = vadd.f32 0.0, %v1135
      %v1137 = vpop.f32.mrb[0].mxu0
      %v1138 = vpop.f32.mrb[0].mxu0
      %v1139 = vadd.f32 0.0, %v1138
      %v1140 = vpop.f32.mrb[0].mxu0
      %1141 = vdwg.mxu0
      %v1142 = vadd.f32 %v836, %v1016
      %v1143 = vadd.f32 %v839, %v1019
      %v1144 = vadd.f32 %v844, %v1024
      %v1145 = vadd.f32 %v847, %v1027
      %v1146 = vadd.f32 %v852, %v1032
      %v1147 = vadd.f32 %v855, %v1035
      %v1148 = vadd.f32 %v860, %v1040
      %v1149 = vadd.f32 %v863, %v1043
      %v1150 = vadd.f32 %v868, %v1048
      %v1151 = vadd.f32 %v871, %v1051
      %v1152 = vadd.f32 %v876, %v1056
      %v1153 = vadd.f32 %v879, %v1059
      %v1154 = vadd.f32 %v884, %v1064
      %v1155 = vadd.f32 %v887, %v1067
      %v1156 = vadd.f32 %v892, %v1072
      %v1157 = vadd.f32 %v895, %v1075
      %v1158 = vadd.f32 %v900, %v1080
      %v1159 = vadd.f32 %v903, %v1083
      %v1160 = vadd.f32 %v908, %v1088
      %v1161 = vadd.f32 %v911, %v1091
      %v1162 = vadd.f32 %v916, %v1096
      %v1163 = vadd.f32 %v919, %v1099
      %v1164 = vadd.f32 %v924, %v1104
      %v1165 = vadd.f32 %v927, %v1107
      %v1166 = vadd.f32 %v932, %v1112
      %v1167 = vadd.f32 %v935, %v1115
      %v1168 = vadd.f32 %v940, %v1120
      %v1169 = vadd.f32 %v943, %v1123
      %v1170 = vadd.f32 %v948, %v1128
      %v1171 = vadd.f32 %v951, %v1131
      %v1172 = vadd.f32 %v956, %v1136
      %v1173 = vadd.f32 %v959, %v1139
      %v1174 = vld [vmem:[%s4] sm:$0x1]
      %v1176 = vlaneseq
      %v1177 = vshrl.u32 %v1176, 7
      %v1178 = vsub.s32 0, %v1177
      %v1179 = vrot.slane %v1174, %v1178
      %v1181 = vadd.f32 %v1142, %v1179
      %v1182 = vadd.f32 %v1143, %v1179
      %v1183 = vadd.f32 %v1144, %v1179
      %v1184 = vadd.f32 %v1145, %v1179
      %v1185 = vadd.f32 %v1146, %v1179
      %v1186 = vadd.f32 %v1147, %v1179
      %v1187 = vadd.f32 %v1148, %v1179
      %v1188 = vadd.f32 %v1149, %v1179
      %v1189 = vadd.f32 %v1150, %v1179
      %v1190 = vadd.f32 %v1151, %v1179
      %v1191 = vadd.f32 %v1152, %v1179
      %v1192 = vadd.f32 %v1153, %v1179
      %v1193 = vadd.f32 %v1154, %v1179
      %v1194 = vadd.f32 %v1155, %v1179
      %v1195 = vadd.f32 %v1156, %v1179
      %v1196 = vadd.f32 %v1157, %v1179
      %v1197 = vadd.f32 %v1158, %v1179
      %v1198 = vadd.f32 %v1159, %v1179
      %v1199 = vadd.f32 %v1160, %v1179
      %v1200 = vadd.f32 %v1161, %v1179
      %v1201 = vadd.f32 %v1162, %v1179
      %v1202 = vadd.f32 %v1163, %v1179
      %v1203 = vadd.f32 %v1164, %v1179
      %v1204 = vadd.f32 %v1165, %v1179
      %v1205 = vadd.f32 %v1166, %v1179
      %v1206 = vadd.f32 %v1167, %v1179
      %v1207 = vadd.f32 %v1168, %v1179
      %v1208 = vadd.f32 %v1169, %v1179
      %v1209 = vadd.f32 %v1170, %v1179
      %v1210 = vadd.f32 %v1171, %v1179
      %v1211 = vadd.f32 %v1172, %v1179
      %v1212 = vadd.f32 %v1173, %v1179
      %v1213 = vmax.f32 %v1181, 0.0
      %v1214 = vmax.f32 %v1182, 0.0
      %v1215 = vmax.f32 %v1183, 0.0
      %v1216 = vmax.f32 %v1184, 0.0
      %v1217 = vmax.f32 %v1185, 0.0
      %v1218 = vmax.f32 %v1186, 0.0
      %v1219 = vmax.f32 %v1187, 0.0
      %v1220 = vmax.f32 %v1188, 0.0
      %v1221 = vmax.f32 %v1189, 0.0
      %v1222 = vmax.f32 %v1190, 0.0
      %v1223 = vmax.f32 %v1191, 0.0
      %v1224 = vmax.f32 %v1192, 0.0
      %v1225 = vmax.f32 %v1193, 0.0
      %v1226 = vmax.f32 %v1194, 0.0
      %v1227 = vmax.f32 %v1195, 0.0
      %v1228 = vmax.f32 %v1196, 0.0
      %v1229 = vmax.f32 %v1197, 0.0
      %v1230 = vmax.f32 %v1198, 0.0
      %v1231 = vmax.f32 %v1199, 0.0
      %v1232 = vmax.f32 %v1200, 0.0
      %v1233 = vmax.f32 %v1201, 0.0
      %v1234 = vmax.f32 %v1202, 0.0
      %v1235 = vmax.f32 %v1203, 0.0
      %v1236 = vmax.f32 %v1204, 0.0
      %v1237 = vmax.f32 %v1205, 0.0
      %v1238 = vmax.f32 %v1206, 0.0
      %v1239 = vmax.f32 %v1207, 0.0
      %v1240 = vmax.f32 %v1208, 0.0
      %v1241 = vmax.f32 %v1209, 0.0
      %v1242 = vmax.f32 %v1210, 0.0
      %v1243 = vmax.f32 %v1211, 0.0
      %v1244 = vmax.f32 %v1212, 0.0
      %v1245 = vpack.c.bf16 %v1214, %v1213
      %v1246 = vpack.c.bf16 %v1216, %v1215
      %v1247 = vpack.c.bf16 %v1218, %v1217
      %v1248 = vpack.c.bf16 %v1220, %v1219
      %v1249 = vpack.c.bf16 %v1222, %v1221
      %v1250 = vpack.c.bf16 %v1224, %v1223
      %v1251 = vpack.c.bf16 %v1226, %v1225
      %v1252 = vpack.c.bf16 %v1228, %v1227
      %v1253 = vpack.c.bf16 %v1230, %v1229
      %v1254 = vpack.c.bf16 %v1232, %v1231
      %v1255 = vpack.c.bf16 %v1234, %v1233
      %v1256 = vpack.c.bf16 %v1236, %v1235
      %v1257 = vpack.c.bf16 %v1238, %v1237
      %v1258 = vpack.c.bf16 %v1240, %v1239
      %v1259 = vpack.c.bf16 %v1242, %v1241
      %v1260 = vpack.c.bf16 %v1244, %v1243
      %v1261 = vld [vmem:[%s5] sm:$0x3]
      %v1262 = vld [vmem:[%s6] sm:$0x1]
      %v1264 = vlaneseq
      %v1265 = vshrl.u32 %v1264, 7
      %v1266 = vsub.s32 0, %v1265
      %v1267 = vrot.slane %v1262, %v1266
      %vm1269 = vcmask 31744
      %v1271 = vsel %vm1269, %v1245, 0
      %v1274 = vsel %vm1269, %v1246, 0
      %v1277 = vsel %vm1269, %v1247, 0
      %v1280 = vsel %vm1269, %v1248, 0
      %v1283 = vsel %vm1269, %v1249, 0
      %v1286 = vsel %vm1269, %v1250, 0
      %v1289 = vsel %vm1269, %v1251, 0
      %v1292 = vsel %vm1269, %v1252, 0
      %v1295 = vsel %vm1269, %v1253, 0
      %v1298 = vsel %vm1269, %v1254, 0
      %v1301 = vsel %vm1269, %v1255, 0
      %v1304 = vsel %vm1269, %v1256, 0
      %v1307 = vsel %vm1269, %v1257, 0
      %v1310 = vsel %vm1269, %v1258, 0
      %v1313 = vsel %vm1269, %v1259, 0
      %v1316 = vsel %vm1269, %v1260, 0
      %vm1318 = vcmask 1041408
      %v1320 = vsel %vm1318, %v1261, 0
      %1322 = vmatprep.subr.bf16.mxu0 0
      %1323 = vmatpush1.bf16.msra.mxu0 %v1320
      %1324 = vmatprep.subr.bf16.mxu0 0
      %1325 = vmatpush1.bf16.msra.mxu0 0
      %1326 = vmatprep.subr.bf16.mxu0 0
      %1327 = vmatpush1.bf16.msra.mxu0 0
      %1328 = vmatprep.subr.bf16.mxu0 0
      %1329 = vmatpush1.bf16.msra.mxu0 0
      %1330 = vmatprep.subr.bf16.mxu0 0
      %1331 = vmatpush1.bf16.msra.mxu0 0
      %1332 = vmatprep.subr.bf16.mxu0 0
      %1333 = vmatpush1.bf16.msra.mxu0 0
      %1334 = vmatprep.subr.bf16.mxu0 0
      %1335 = vmatpush1.bf16.msra.mxu0 0
      %1336 = vmatprep.subr.bf16.mxu0 0
      %1337 = vmatpush1.bf16.msra.mxu0 0
      %1338 = vmatprep.subr.bf16.mxu0 0
      %1339 = vmatpush1.bf16.msra.mxu0 0
      %1340 = vmatprep.subr.bf16.mxu0 0
      %1341 = vmatpush1.bf16.msra.mxu0 0
      %1342 = vmatprep.subr.bf16.mxu0 0
      %1343 = vmatpush1.bf16.msra.mxu0 0
      %1344 = vmatprep.subr.bf16.mxu0 0
      %1345 = vmatpush1.bf16.msra.mxu0 0
      %1346 = vmatprep.subr.bf16.mxu0 0
      %1347 = vmatpush1.bf16.msra.mxu0 0
      %1348 = vmatprep.subr.bf16.mxu0 0
      %1349 = vmatpush1.bf16.msra.mxu0 0
      %1350 = vmatprep.subr.bf16.mxu0 0
      %1351 = vmatpush1.bf16.msra.mxu0 0
      %1352 = vmatprep.subr.bf16.mxu0 0
      %1353 = vmatpush1.bf16.msra.mxu0 0
      %1354 = vmatprep.mubr.bf16.mxu0 0
      %1355 = vmatmul.mubr.bf16.gmra.mrb[0].mxu0 %v1271
      %v1356 = vpop.f32.mrb[0].mxu0
      %v1357 = vadd.f32 %v1267, %v1356
      %v1358 = vpop.f32.mrb[0].mxu0
      %v1359 = vpop.f32.mrb[0].mxu0
      %v1360 = vadd.f32 %v1267, %v1359
      %v1361 = vpop.f32.mrb[0].mxu0
      %1362 = vmatprep.mubr.bf16.mxu0 0
      %1363 = vmatmul.mubr.bf16.gmra.mrb[0].mxu0 %v1274
      %v1364 = vpop.f32.mrb[0].mxu0
      %v1365 = vadd.f32 %v1267, %v1364
      %v1366 = vpop.f32.mrb[0].mxu0
      %v1367 = vpop.f32.mrb[0].mxu0
      %v1368 = vadd.f32 %v1267, %v1367
      %v1369 = vpop.f32.mrb[0].mxu0
      %1370 = vmatprep.mubr.bf16.mxu0 0
      %1371 = vmatmul.mubr.bf16.gmra.mrb[0].mxu0 %v1277
      %v1372 = vpop.f32.mrb[0].mxu0
      %v1373 = vadd.f32 %v1267, %v1372
      %v1374 = vpop.f32.mrb[0].mxu0
      %v1375 = vpop.f32.mrb[0].mxu0
      %v1376 = vadd.f32 %v1267, %v1375
      %v1377 = vpop.f32.mrb[0].mxu0
      %1378 = vmatprep.mubr.bf16.mxu0 0
      %1379 = vmatmul.mubr.bf16.gmra.mrb[0].mxu0 %v1280
      %v1380 = vpop.f32.mrb[0].mxu0
      %v1381 = vadd.f32 %v1267, %v1380
      %v1382 = vpop.f32.mrb[0].mxu0
      %v1383 = vpop.f32.mrb[0].mxu0
      %v1384 = vadd.f32 %v1267, %v1383
      %v1385 = vpop.f32.mrb[0].mxu0
      %1386 = vmatprep.mubr.bf16.mxu0 0
      %1387 = vmatmul.mubr.bf16.gmra.mrb[0].mxu0 %v1283
      %v1388 = vpop.f32.mrb[0].mxu0
      %v1389 = vadd.f32 %v1267, %v1388
      %v1390 = vpop.f32.mrb[0].mxu0
      %v1391 = vpop.f32.mrb[0].mxu0
      %v1392 = vadd.f32 %v1267, %v1391
      %v1393 = vpop.f32.mrb[0].mxu0
      %1394 = vmatprep.mubr.bf16.mxu0 0
      %1395 = vmatmul.mubr.bf16.gmra.mrb[0].mxu0 %v1286
      %v1396 = vpop.f32.mrb[0].mxu0
      %v1397 = vadd.f32 %v1267, %v1396
      %v1398 = vpop.f32.mrb[0].mxu0
      %v1399 = vpop.f32.mrb[0].mxu0
      %v1400 = vadd.f32 %v1267, %v1399
      %v1401 = vpop.f32.mrb[0].mxu0
      %1402 = vmatprep.mubr.bf16.mxu0 0
      %1403 = vmatmul.mubr.bf16.gmra.mrb[0].mxu0 %v1289
      %v1404 = vpop.f32.mrb[0].mxu0
      %v1405 = vadd.f32 %v1267, %v1404
      %v1406 = vpop.f32.mrb[0].mxu0
      %v1407 = vpop.f32.mrb[0].mxu0
      %v1408 = vadd.f32 %v1267, %v1407
      %v1409 = vpop.f32.mrb[0].mxu0
      %1410 = vmatprep.mubr.bf16.mxu0 0
      %1411 = vmatmul.mubr.bf16.gmra.mrb[0].mxu0 %v1292
      %v1412 = vpop.f32.mrb[0].mxu0
      %v1413 = vadd.f32 %v1267, %v1412
      %v1414 = vpop.f32.mrb[0].mxu0
      %v1415 = vpop.f32.mrb[0].mxu0
      %v1416 = vadd.f32 %v1267, %v1415
      %v1417 = vpop.f32.mrb[0].mxu0
      %1418 = vmatprep.mubr.bf16.mxu0 0
      %1419 = vmatmul.mubr.bf16.gmra.mrb[0].mxu0 %v1295
      %v1420 = vpop.f32.mrb[0].mxu0
      %v1421 = vadd.f32 %v1267, %v1420
      %v1422 = vpop.f32.mrb[0].mxu0
      %v1423 = vpop.f32.mrb[0].mxu0
      %v1424 = vadd.f32 %v1267, %v1423
      %v1425 = vpop.f32.mrb[0].mxu0
      %1426 = vmatprep.mubr.bf16.mxu0 0
      %1427 = vmatmul.mubr.bf16.gmra.mrb[0].mxu0 %v1298
      %v1428 = vpop.f32.mrb[0].mxu0
      %v1429 = vadd.f32 %v1267, %v1428
      %v1430 = vpop.f32.mrb[0].mxu0
      %v1431 = vpop.f32.mrb[0].mxu0
      %v1432 = vadd.f32 %v1267, %v1431
      %v1433 = vpop.f32.mrb[0].mxu0
      %1434 = vmatprep.mubr.bf16.mxu0 0
      %1435 = vmatmul.mubr.bf16.gmra.mrb[0].mxu0 %v1301
      %v1436 = vpop.f32.mrb[0].mxu0
      %v1437 = vadd.f32 %v1267, %v1436
      %v1438 = vpop.f32.mrb[0].mxu0
      %v1439 = vpop.f32.mrb[0].mxu0
      %v1440 = vadd.f32 %v1267, %v1439
      %v1441 = vpop.f32.mrb[0].mxu0
      %1442 = vmatprep.mubr.bf16.mxu0 0
      %1443 = vmatmul.mubr.bf16.gmra.mrb[0].mxu0 %v1304
      %v1444 = vpop.f32.mrb[0].mxu0
      %v1445 = vadd.f32 %v1267, %v1444
      %v1446 = vpop.f32.mrb[0].mxu0
      %v1447 = vpop.f32.mrb[0].mxu0
      %v1448 = vadd.f32 %v1267, %v1447
      %v1449 = vpop.f32.mrb[0].mxu0
      %1450 = vmatprep.mubr.bf16.mxu0 0
      %1451 = vmatmul.mubr.bf16.gmra.mrb[0].mxu0 %v1307
      %v1452 = vpop.f32.mrb[0].mxu0
      %v1453 = vadd.f32 %v1267, %v1452
      %v1454 = vpop.f32.mrb[0].mxu0
      %v1455 = vpop.f32.mrb[0].mxu0
      %v1456 = vadd.f32 %v1267, %v1455
      %v1457 = vpop.f32.mrb[0].mxu0
      %1458 = vmatprep.mubr.bf16.mxu0 0
      %1459 = vmatmul.mubr.bf16.gmra.mrb[0].mxu0 %v1310
      %v1460 = vpop.f32.mrb[0].mxu0
      %v1461 = vadd.f32 %v1267, %v1460
      %v1462 = vpop.f32.mrb[0].mxu0
      %v1463 = vpop.f32.mrb[0].mxu0
      %v1464 = vadd.f32 %v1267, %v1463
      %v1465 = vpop.f32.mrb[0].mxu0
      %1466 = vmatprep.mubr.bf16.mxu0 0
      %1467 = vmatmul.mubr.bf16.gmra.mrb[0].mxu0 %v1313
      %v1468 = vpop.f32.mrb[0].mxu0
      %v1469 = vadd.f32 %v1267, %v1468
      %v1470 = vpop.f32.mrb[0].mxu0
      %v1471 = vpop.f32.mrb[0].mxu0
      %v1472 = vadd.f32 %v1267, %v1471
      %v1473 = vpop.f32.mrb[0].mxu0
      %1474 = vmatprep.mubr.bf16.mxu0 0
      %1475 = vmatmul.mubr.bf16.gmra.mrb[0].mxu0 %v1316
      %v1476 = vpop.f32.mrb[0].mxu0
      %v1477 = vadd.f32 %v1267, %v1476
      %v1478 = vpop.f32.mrb[0].mxu0
      %v1479 = vpop.f32.mrb[0].mxu0
      %v1480 = vadd.f32 %v1267, %v1479
      %v1481 = vpop.f32.mrb[0].mxu0
      %1482 = vdwg.mxu0
      %1483 = vst [vmem:[%s442] sm:$0xff] %v1357
      %1484 = vst [vmem:[%s442 + $0x8] sm:$0xff] %v1360
      %1485 = vst [vmem:[%s442 + $0x10] sm:$0xff] %v1365
      %1486 = vst [vmem:[%s442 + $0x18] sm:$0xff] %v1368
      %1487 = vst [vmem:[%s442 + $0x20] sm:$0xff] %v1373
      %1488 = vst [vmem:[%s442 + $0x28] sm:$0xff] %v1376
      %1489 = vst [vmem:[%s442 + $0x30] sm:$0xff] %v1381
      %1490 = vst [vmem:[%s442 + $0x38] sm:$0xff] %v1384
      %1491 = vst [vmem:[%s442 + $0x40] sm:$0xff] %v1389
      %1492 = vst [vmem:[%s442 + $0x48] sm:$0xff] %v1392
      %1493 = vst [vmem:[%s442 + $0x50] sm:$0xff] %v1397
      %1494 = vst [vmem:[%s442 + $0x58] sm:$0xff] %v1400
      %1495 = vst [vmem:[%s442 + $0x60] sm:$0xff] %v1405
      %1496 = vst [vmem:[%s442 + $0x68] sm:$0xff] %v1408
      %1497 = vst [vmem:[%s442 + $0x70] sm:$0xff] %v1413
      %1498 = vst [vmem:[%s442 + $0x78] sm:$0xff] %v1416
      %1499 = vst [vmem:[%s442 + $0x80] sm:$0xff] %v1421
      %1500 = vst [vmem:[%s442 + $0x88] sm:$0xff] %v1424
      %1501 = vst [vmem:[%s442 + $0x90] sm:$0xff] %v1429
      %1502 = vst [vmem:[%s442 + $0x98] sm:$0xff] %v1432
      %1503 = vst [vmem:[%s442 + $0xa0] sm:$0xff] %v1437
      %1504 = vst [vmem:[%s442 + $0xa8] sm:$0xff] %v1440
      %1505 = vst [vmem:[%s442 + $0xb0] sm:$0xff] %v1445
      %1506 = vst [vmem:[%s442 + $0xb8] sm:$0xff] %v1448
      %1507 = vst [vmem:[%s442 + $0xc0] sm:$0xff] %v1453
      %1508 = vst [vmem:[%s442 + $0xc8] sm:$0xff] %v1456
      %1509 = vst [vmem:[%s442 + $0xd0] sm:$0xff] %v1461
      %1510 = vst [vmem:[%s442 + $0xd8] sm:$0xff] %v1464
      %1511 = vst [vmem:[%s442 + $0xe0] sm:$0xff] %v1469
      %1512 = vst [vmem:[%s442 + $0xe8] sm:$0xff] %v1472
      %1513 = vst [vmem:[%s442 + $0xf0] sm:$0xff] %v1477
      %1514 = vst [vmem:[%s442 + $0xf8] sm:$0xff] %v1480
      %s1515 = smul.u32 16, %s23
      %p1516 = scmp.lt.s32.totalorder %s22, 1
      %s1517 = scalar_select %p1516, %s22, 1
      %p1518 = scmp.lt.s32.totalorder %s1515, 15
      %s1519 = scalar_select %p1518, %s1515, 15
      %s1520 = smul.addr %s1519, 2
      %s1521 = smul.addr %s1517, 32
      %s1522 = sadd.s32 %s1520, %s1521
      %s1523 = smul.addr %s1522, 8
      %s1524 = scalar_lea.vmem %s7, %s1523
      // Predicated region
      $region49: #{rpn_head_forward.1} parent=47 // pred_check
        %p1525 = pneg %p226
      $region50: #{rpn_head_forward.1} parent=47 // pred_check_branch
        %1527 = sbr.rel (%p1525) target = $region52
      $region51: #{rpn_head_forward.1} parent=47 // pred_region
        %s1528 = smul.u32 16, %s23
      $region52: #{rpn_head_forward.1} parent=47 // pred_fallthru
        _
    $region48: #{rpn_head_forward.1} parent=5 // pred_fallthru
      _
    %p1529 = scmp.le.s32.totalorder 2, %s13
    // Predicated region
    $region53: #{rpn_head_forward.1} parent=5 // pred_check
      %p1530 = pneg %p1529
    $region54: #{rpn_head_forward.1} parent=5 // pred_check_branch
      %1532 = sbr.rel (%p1530) target = $region56
    $region55: #{rpn_head_forward.1} parent=5 // pred_region
      %s1533 = ssub.s32 %s13, 2
      // Predicated region
      $region57: #{rpn_head_forward.1} parent=55 // pred_check
        %p1534 = pneg %p232
      $region58: #{rpn_head_forward.1} parent=55 // pred_check_branch
        %1536 = sbr.rel (%p1534) target = $region60
      $region59: #{rpn_head_forward.1} parent=55 // pred_region
        %s1537 = smul.u32 16, %s25
        %p1538 = scmp.lt.s32.totalorder %s24, 1
        %s1539 = scalar_select %p1538, %s24, 1
        %p1540 = scmp.lt.s32.totalorder %s1537, 15
        %s1541 = scalar_select %p1540, %s1537, 15
        %s1542 = smul.addr %s1541, 2
        %s1543 = smul.addr %s1539, 32
        %s1544 = sadd.s32 %s1542, %s1543
        %s1545 = smul.addr %s1544, 8
        %s1546 = scalar_lea.vmem %s7, %s1545
      $region60: #{rpn_head_forward.1} parent=55 // pred_fallthru
        _
    $region56: #{rpn_head_forward.1} parent=5 // pred_fallthru
      _
  $region6: #{rpn_head_forward.1} parent=0 // loop_footer
    %s17 = sadd.s32 1, %s13
  $region7: #{rpn_head_forward.1} parent=0 // loop_footer_branch
    %12 = sbr.rel target = $region3
  $region8: #{rpn_head_forward.1} parent=0 // loop_exit
    _

</llo_original>
